<compile_context>
chip_gen: v7x
topology: tpu7x:2x2x1
jax: 0.10.0
libtpu: 0.0.40
codegen_flags: <defaults>
</compile_context>

<pallas_src>
import jax
import jax.numpy as jnp
from jax import lax
from jax.experimental import pallas as pl
from jax.experimental.pallas import tpu as pltpu

LN_EPS = 1e-5  # PyTorch nn.LayerNorm default eps


def _choose_seq_tile(S):
    """Largest row-block (multiple of 8, <=512) dividing S; fall back to S itself
    (a block equal to the full dim is always layout-legal)."""
    for cand in (512, 256, 128, 64, 32, 16, 8):
        if S % cand == 0:
            return cand
    return S


def embedding_forward(x, seg, tok_table, pos_table, seg_table, gamma, beta, *, validate=False):
    """tok_embed(x) + pos_embed(arange(S)) + seg_embed(seg), then LayerNorm over d_model."""
    B, S = x.shape
    V, D = tok_table.shape
    max_len = pos_table.shape[0]
    NSEG = seg_table.shape[0]
    assert S <= max_len, "sequence length exceeds positional table"

    if validate:
        # TODO(synk): mirrors the PyTorch ValueError checks; needs a host sync so it is
        # off by default and not part of the kernel itself.
        if bool((x < 0).any()) or bool((x >= V).any()):
            raise ValueError('input_ids contains invalid indices.')
        if bool((seg < 0).any()) or bool((seg >= NSEG).any()):
            raise ValueError('segment_ids contains invalid indices.')

    TS = _choose_seq_tile(S)
    num_s_blocks = S // TS
    unroll_dma = TS <= 64  # statically unroll the DMA issue/wait loops when cheap

    tok_ids = x.reshape(-1).astype(jnp.int32)          # (B*S,)  -> SMEM via scalar prefetch
    seg_ids = seg.reshape(B, S, 1).astype(jnp.int32)   # (B,S,1) -> VMEM tiles
    pos_rows = pos_table[:S]                           # only the rows actually used
    params = jnp.concatenate([gamma.reshape(1, D), beta.reshape(1, D)], axis=0)  # (2, D)

    def kernel(tok_ids_smem,   # (B*S,) int32 SMEM (scalar prefetch)
               tok_hbm,        # (V, D) HBM ref (pl.ANY) — gathered manually
               pos_ref,        # (TS, D) VMEM tile
               seg_ref,        # (TS, 1) int32 VMEM tile
               segtab_ref,     # (NSEG, D) VMEM resident
               params_ref,     # (2, D) VMEM resident: [gamma; beta]
               out_ref,        # (TS, D) output tile
               gbuf, sem):     # scratch: (TS, D) gather buffer + DMA semaphore
        b = pl.program_id(0)
        sblk = pl.program_id(1)
        base = b * S + sblk * TS                       # flat row offset of this tile

        def row_copy(r):
            row = tok_ids_smem[base + r]
            return pltpu.make_async_copy(tok_hbm.at[pl.ds(row, 1)],
                                         gbuf.at[pl.ds(r, 1)],
                                         sem.at[0])

        # Batched row gather: issue all TS row DMAs (kept in flight together), then wait.
        if unroll_dma:
            copies = [row_copy(r) for r in range(TS)]
            for c in copies:
                c.start()
            for c in copies:
                c.wait()
        else:
            @pl.loop(0, TS)
            def _issue(r):
                row_copy(r).start()

            @pl.loop(0, TS)
            def _retire(r):
                row_copy(r).wait()

        tok_rows = gbuf[...].astype(jnp.float32)       # (TS, D)
        pos = pos_ref[...].astype(jnp.float32)         # (TS, D)

        # Segment embedding: tiny table is VMEM-resident; per-row select on the VPU.
        seg_id = seg_ref[...]                          # (TS, 1) int32
        seg_sel = jnp.zeros((TS, D), jnp.float32)
        for sgi in range(NSEG):                        # NSEG is tiny (2 for BERT) and static
            mask = jnp.where(seg_id == sgi, 1.0, 0.0)  # (TS, 1)
            seg_sel = seg_sel + mask * segtab_ref[sgi:sgi + 1, :].astype(jnp.float32)

        e = tok_rows + pos + seg_sel                   # (TS, D)
        mean = jnp.mean(e, axis=-1, keepdims=True)
        diff = e - mean
        var = jnp.mean(diff * diff, axis=-1, keepdims=True)
        inv = lax.rsqrt(var + LN_EPS)
        g = params_ref[0:1, :].astype(jnp.float32)
        bt = params_ref[1:2, :].astype(jnp.float32)
        out_ref[...] = ((diff * inv) * g + bt).astype(out_ref.dtype)

    grid_spec = pltpu.PrefetchScalarGridSpec(
        num_scalar_prefetch=1,                         # token ids -> SMEM, drive the gather
        grid=(B, num_s_blocks),
        in_specs=[
            pl.BlockSpec(memory_space=pl.ANY),                          # tok_table stays in HBM
            pl.BlockSpec((TS, D), lambda b, s, tok: (s, 0)),            # positional rows
            pl.BlockSpec((None, TS, 1), lambda b, s, tok: (b, s, 0)),   # segment ids
            pl.BlockSpec((NSEG, D), lambda b, s, tok: (0, 0)),          # segment table (resident)
            pl.BlockSpec((2, D), lambda b, s, tok: (0, 0)),             # gamma/beta (resident)
        ],
        out_specs=pl.BlockSpec((None, TS, D), lambda b, s, tok: (b, s, 0)),
        scratch_shapes=[
            pltpu.VMEM((TS, D), tok_table.dtype),
            pltpu.SemaphoreType.DMA((1,)),
        ],
    )

    return pl.pallas_call(
        kernel,
        out_shape=jax.ShapeDtypeStruct((B, S, D), jnp.float32),
        grid_spec=grid_spec,
        compiler_params=pltpu.CompilerParams(
            dimension_semantics=("parallel", "parallel"),
        ),
    )(tok_ids, tok_table, pos_rows, seg_ids, seg_table, params)


def reference_forward(x, seg, tok_table, pos_table, seg_table, gamma, beta):
    S = x.shape[1]
    pos = jnp.arange(S, dtype=jnp.int32)[None, :]
    e = tok_table[x] + pos_table[pos] + seg_table[seg]
    mean = jnp.mean(e, axis=-1, keepdims=True)
    var = jnp.mean((e - mean) ** 2, axis=-1, keepdims=True)
    return (e - mean) * lax.rsqrt(var + LN_EPS) * gamma + beta


if __name__ == "__main__":
    # Small, deterministic setup: vocab=50, max_len=16, n_segments=2, d_model=32, batch=2, seq=8.
    vocab_size, max_len, n_segments, d_model = 50, 16, 2, 32
    B, S = 2, 8

    key = jax.random.PRNGKey(0)
    k_tok, k_pos, k_seg, k_x, k_s = jax.random.split(key, 5)

    # nn.Embedding default init ~ N(0, 1); LayerNorm gamma=1, beta=0.
    tok_table = jax.random.normal(k_tok, (vocab_size, d_model), dtype=jnp.float32)
    pos_table = jax.random.normal(k_pos, (max_len, d_model), dtype=jnp.float32)
    seg_table = jax.random.normal(k_seg, (n_segments, d_model), dtype=jnp.float32)
    gamma = jnp.ones((d_model,), dtype=jnp.float32)
    beta = jnp.zeros((d_model,), dtype=jnp.float32)

    x = jax.random.randint(k_x, (B, S), 0, vocab_size, dtype=jnp.int32)
    seg = jax.random.randint(k_s, (B, S), 0, n_segments, dtype=jnp.int32)

    out = embedding_forward(x, seg, tok_table, pos_table, seg_table, gamma, beta, validate=True)
    out = jax.block_until_ready(out)

    ref = reference_forward(x, seg, tok_table, pos_table, seg_table, gamma, beta)
    assert out.shape == (B, S, d_model)
    assert jnp.allclose(out, ref, atol=1e-5, rtol=1e-5)

    print("KERNEL_OK")
</pallas_src>

<mosaic_0001>
module attributes {stable_mosaic.version = 11 : i64} {
  func.func @kernel(%arg0: i32, %arg1: i32, %arg2: memref<16xi32, #tpu.memory_space<smem>>, %arg3: memref<50x32xf32, #tpu.memory_space<any>>, %arg4: memref<8x32xf32, #tpu.memory_space<vmem>>, %arg5: memref<1x8x1xi32, #tpu.memory_space<vmem>>, %arg6: memref<2x32xf32, #tpu.memory_space<vmem>>, %arg7: memref<2x32xf32, #tpu.memory_space<vmem>>, %arg8: memref<1x8x32xf32, #tpu.memory_space<vmem>>, %arg9: memref<8x32xf32, #tpu.memory_space<vmem>>, %arg10: memref<1x!tpu.dma_semaphore, #tpu.memory_space<semaphore_mem>>) attributes {dimension_semantics = [#tpu.dimension_semantics<parallel>, #tpu.dimension_semantics<parallel>], iteration_bounds = array<i64: 2, 1>, scalar_prefetch = 1 : i64, scratch_operands = 2 : i64, tpu.core_type = #tpu.core_type<tc>, window_params = [{}, {transform_indices = @transform_1, window_bounds = array<i64: 8, 32>}, {transform_indices = @transform_2, window_bounds = array<i64: 1, 8, 1>}, {pipeline_mode = #tpu.pipeline_mode<synchronous>, transform_indices = @transform_3, window_bounds = array<i64: 2, 32>}, {pipeline_mode = #tpu.pipeline_mode<synchronous>, transform_indices = @transform_4, window_bounds = array<i64: 2, 32>}, {transform_indices = @transform_5, window_bounds = array<i64: 1, 8, 32>}]} {
    %c8_i32 = arith.constant 8 : i32
    %0 = arith.muli %arg0, %c8_i32 : i32
    %c8_i32_0 = arith.constant 8 : i32
    %1 = arith.muli %arg1, %c8_i32_0 : i32
    %2 = arith.addi %0, %1 : i32
    %c0_i32 = arith.constant 0 : i32
    %3 = arith.addi %2, %c0_i32 : i32
    %4 = arith.index_cast %3 : i32 to index
    %5 = memref.load %arg2[%4] : memref<16xi32, #tpu.memory_space<smem>>
    %c1_i32 = arith.constant 1 : i32
    %6 = arith.addi %2, %c1_i32 : i32
    %7 = arith.index_cast %6 : i32 to index
    %8 = memref.load %arg2[%7] : memref<16xi32, #tpu.memory_space<smem>>
    %c2_i32 = arith.constant 2 : i32
    %9 = arith.addi %2, %c2_i32 : i32
    %10 = arith.index_cast %9 : i32 to index
    %11 = memref.load %arg2[%10] : memref<16xi32, #tpu.memory_space<smem>>
    %c3_i32 = arith.constant 3 : i32
    %12 = arith.addi %2, %c3_i32 : i32
    %13 = arith.index_cast %12 : i32 to index
    %14 = memref.load %arg2[%13] : memref<16xi32, #tpu.memory_space<smem>>
    %c4_i32 = arith.constant 4 : i32
    %15 = arith.addi %2, %c4_i32 : i32
    %16 = arith.index_cast %15 : i32 to index
    %17 = memref.load %arg2[%16] : memref<16xi32, #tpu.memory_space<smem>>
    %c5_i32 = arith.constant 5 : i32
    %18 = arith.addi %2, %c5_i32 : i32
    %19 = arith.index_cast %18 : i32 to index
    %20 = memref.load %arg2[%19] : memref<16xi32, #tpu.memory_space<smem>>
    %c6_i32 = arith.constant 6 : i32
    %21 = arith.addi %2, %c6_i32 : i32
    %22 = arith.index_cast %21 : i32 to index
    %23 = memref.load %arg2[%22] : memref<16xi32, #tpu.memory_space<smem>>
    %c7_i32 = arith.constant 7 : i32
    %24 = arith.addi %2, %c7_i32 : i32
    %25 = arith.index_cast %24 : i32 to index
    %26 = memref.load %arg2[%25] : memref<16xi32, #tpu.memory_space<smem>>
    %c0_i32_1 = arith.constant 0 : i32
    %c0_i32_2 = arith.constant 0 : i32
    %27 = tpu.memref_slice %arg3[%5, %c0_i32_2] : memref<50x32xf32, #tpu.memory_space<any>> -> memref<1x32xf32, #tpu.memory_space<any>>
    %c0_i32_3 = arith.constant 0 : i32
    %c0_i32_4 = arith.constant 0 : i32
    %28 = tpu.memref_slice %arg9[%c0_i32_3, %c0_i32_4] : memref<8x32xf32, #tpu.memory_space<vmem>> -> memref<1x32xf32, #tpu.memory_space<vmem>>
    %29 = tpu.memref_slice %arg10[%c0_i32_1] : memref<1x!tpu.dma_semaphore, #tpu.memory_space<semaphore_mem>> -> memref<1x!tpu.dma_semaphore, #tpu.memory_space<semaphore_mem>>
    %30 = tpu.memref_squeeze %29 : memref<1x!tpu.dma_semaphore, #tpu.memory_space<semaphore_mem>> -> memref<!tpu.dma_semaphore, #tpu.memory_space<semaphore_mem>>
    tpu.enqueue_dma source(%27 : memref<1x32xf32, #tpu.memory_space<any>>) target(%28 : memref<1x32xf32, #tpu.memory_space<vmem>>) target_semaphore(%30 : memref<!tpu.dma_semaphore, #tpu.memory_space<semaphore_mem>>)
    %c0_i32_5 = arith.constant 0 : i32
    %c0_i32_6 = arith.constant 0 : i32
    %31 = tpu.memref_slice %arg3[%8, %c0_i32_6] : memref<50x32xf32, #tpu.memory_space<any>> -> memref<1x32xf32, #tpu.memory_space<any>>
    %c1_i32_7 = arith.constant 1 : i32
    %c0_i32_8 = arith.constant 0 : i32
    %32 = tpu.memref_slice %arg9[%c1_i32_7, %c0_i32_8] : memref<8x32xf32, #tpu.memory_space<vmem>> -> memref<1x32xf32, #tpu.memory_space<vmem>>
    %33 = tpu.memref_slice %arg10[%c0_i32_5] : memref<1x!tpu.dma_semaphore, #tpu.memory_space<semaphore_mem>> -> memref<1x!tpu.dma_semaphore, #tpu.memory_space<semaphore_mem>>
    %34 = tpu.memref_squeeze %33 : memref<1x!tpu.dma_semaphore, #tpu.memory_space<semaphore_mem>> -> memref<!tpu.dma_semaphore, #tpu.memory_space<semaphore_mem>>
    tpu.enqueue_dma source(%31 : memref<1x32xf32, #tpu.memory_space<any>>) target(%32 : memref<1x32xf32, #tpu.memory_space<vmem>>) target_semaphore(%34 : memref<!tpu.dma_semaphore, #tpu.memory_space<semaphore_mem>>)
    %c0_i32_9 = arith.constant 0 : i32
    %c0_i32_10 = arith.constant 0 : i32
    %35 = tpu.memref_slice %arg3[%11, %c0_i32_10] : memref<50x32xf32, #tpu.memory_space<any>> -> memref<1x32xf32, #tpu.memory_space<any>>
    %c2_i32_11 = arith.constant 2 : i32
    %c0_i32_12 = arith.constant 0 : i32
    %36 = tpu.memref_slice %arg9[%c2_i32_11, %c0_i32_12] : memref<8x32xf32, #tpu.memory_space<vmem>> -> memref<1x32xf32, #tpu.memory_space<vmem>>
    %37 = tpu.memref_slice %arg10[%c0_i32_9] : memref<1x!tpu.dma_semaphore, #tpu.memory_space<semaphore_mem>> -> memref<1x!tpu.dma_semaphore, #tpu.memory_space<semaphore_mem>>
    %38 = tpu.memref_squeeze %37 : memref<1x!tpu.dma_semaphore, #tpu.memory_space<semaphore_mem>> -> memref<!tpu.dma_semaphore, #tpu.memory_space<semaphore_mem>>
    tpu.enqueue_dma source(%35 : memref<1x32xf32, #tpu.memory_space<any>>) target(%36 : memref<1x32xf32, #tpu.memory_space<vmem>>) target_semaphore(%38 : memref<!tpu.dma_semaphore, #tpu.memory_space<semaphore_mem>>)
    %c0_i32_13 = arith.constant 0 : i32
    %c0_i32_14 = arith.constant 0 : i32
    %39 = tpu.memref_slice %arg3[%14, %c0_i32_14] : memref<50x32xf32, #tpu.memory_space<any>> -> memref<1x32xf32, #tpu.memory_space<any>>
    %c3_i32_15 = arith.constant 3 : i32
    %c0_i32_16 = arith.constant 0 : i32
    %40 = tpu.memref_slice %arg9[%c3_i32_15, %c0_i32_16] : memref<8x32xf32, #tpu.memory_space<vmem>> -> memref<1x32xf32, #tpu.memory_space<vmem>>
    %41 = tpu.memref_slice %arg10[%c0_i32_13] : memref<1x!tpu.dma_semaphore, #tpu.memory_space<semaphore_mem>> -> memref<1x!tpu.dma_semaphore, #tpu.memory_space<semaphore_mem>>
    %42 = tpu.memref_squeeze %41 : memref<1x!tpu.dma_semaphore, #tpu.memory_space<semaphore_mem>> -> memref<!tpu.dma_semaphore, #tpu.memory_space<semaphore_mem>>
    tpu.enqueue_dma source(%39 : memref<1x32xf32, #tpu.memory_space<any>>) target(%40 : memref<1x32xf32, #tpu.memory_space<vmem>>) target_semaphore(%42 : memref<!tpu.dma_semaphore, #tpu.memory_space<semaphore_mem>>)
    %c0_i32_17 = arith.constant 0 : i32
    %c0_i32_18 = arith.constant 0 : i32
    %43 = tpu.memref_slice %arg3[%17, %c0_i32_18] : memref<50x32xf32, #tpu.memory_space<any>> -> memref<1x32xf32, #tpu.memory_space<any>>
    %c4_i32_19 = arith.constant 4 : i32
    %c0_i32_20 = arith.constant 0 : i32
    %44 = tpu.memref_slice %arg9[%c4_i32_19, %c0_i32_20] : memref<8x32xf32, #tpu.memory_space<vmem>> -> memref<1x32xf32, #tpu.memory_space<vmem>>
    %45 = tpu.memref_slice %arg10[%c0_i32_17] : memref<1x!tpu.dma_semaphore, #tpu.memory_space<semaphore_mem>> -> memref<1x!tpu.dma_semaphore, #tpu.memory_space<semaphore_mem>>
    %46 = tpu.memref_squeeze %45 : memref<1x!tpu.dma_semaphore, #tpu.memory_space<semaphore_mem>> -> memref<!tpu.dma_semaphore, #tpu.memory_space<semaphore_mem>>
    tpu.enqueue_dma source(%43 : memref<1x32xf32, #tpu.memory_space<any>>) target(%44 : memref<1x32xf32, #tpu.memory_space<vmem>>) target_semaphore(%46 : memref<!tpu.dma_semaphore, #tpu.memory_space<semaphore_mem>>)
    %c0_i32_21 = arith.constant 0 : i32
    %c0_i32_22 = arith.constant 0 : i32
    %47 = tpu.memref_slice %arg3[%20, %c0_i32_22] : memref<50x32xf32, #tpu.memory_space<any>> -> memref<1x32xf32, #tpu.memory_space<any>>
    %c5_i32_23 = arith.constant 5 : i32
    %c0_i32_24 = arith.constant 0 : i32
    %48 = tpu.memref_slice %arg9[%c5_i32_23, %c0_i32_24] : memref<8x32xf32, #tpu.memory_space<vmem>> -> memref<1x32xf32, #tpu.memory_space<vmem>>
    %49 = tpu.memref_slice %arg10[%c0_i32_21] : memref<1x!tpu.dma_semaphore, #tpu.memory_space<semaphore_mem>> -> memref<1x!tpu.dma_semaphore, #tpu.memory_space<semaphore_mem>>
    %50 = tpu.memref_squeeze %49 : memref<1x!tpu.dma_semaphore, #tpu.memory_space<semaphore_mem>> -> memref<!tpu.dma_semaphore, #tpu.memory_space<semaphore_mem>>
    tpu.enqueue_dma source(%47 : memref<1x32xf32, #tpu.memory_space<any>>) target(%48 : memref<1x32xf32, #tpu.memory_space<vmem>>) target_semaphore(%50 : memref<!tpu.dma_semaphore, #tpu.memory_space<semaphore_mem>>)
    %c0_i32_25 = arith.constant 0 : i32
    %c0_i32_26 = arith.constant 0 : i32
    %51 = tpu.memref_slice %arg3[%23, %c0_i32_26] : memref<50x32xf32, #tpu.memory_space<any>> -> memref<1x32xf32, #tpu.memory_space<any>>
    %c6_i32_27 = arith.constant 6 : i32
    %c0_i32_28 = arith.constant 0 : i32
    %52 = tpu.memref_slice %arg9[%c6_i32_27, %c0_i32_28] : memref<8x32xf32, #tpu.memory_space<vmem>> -> memref<1x32xf32, #tpu.memory_space<vmem>>
    %53 = tpu.memref_slice %arg10[%c0_i32_25] : memref<1x!tpu.dma_semaphore, #tpu.memory_space<semaphore_mem>> -> memref<1x!tpu.dma_semaphore, #tpu.memory_space<semaphore_mem>>
    %54 = tpu.memref_squeeze %53 : memref<1x!tpu.dma_semaphore, #tpu.memory_space<semaphore_mem>> -> memref<!tpu.dma_semaphore, #tpu.memory_space<semaphore_mem>>
    tpu.enqueue_dma source(%51 : memref<1x32xf32, #tpu.memory_space<any>>) target(%52 : memref<1x32xf32, #tpu.memory_space<vmem>>) target_semaphore(%54 : memref<!tpu.dma_semaphore, #tpu.memory_space<semaphore_mem>>)
    %c0_i32_29 = arith.constant 0 : i32
    %c0_i32_30 = arith.constant 0 : i32
    %55 = tpu.memref_slice %arg3[%26, %c0_i32_30] : memref<50x32xf32, #tpu.memory_space<any>> -> memref<1x32xf32, #tpu.memory_space<any>>
    %c7_i32_31 = arith.constant 7 : i32
    %c0_i32_32 = arith.constant 0 : i32
    %56 = tpu.memref_slice %arg9[%c7_i32_31, %c0_i32_32] : memref<8x32xf32, #tpu.memory_space<vmem>> -> memref<1x32xf32, #tpu.memory_space<vmem>>
    %57 = tpu.memref_slice %arg10[%c0_i32_29] : memref<1x!tpu.dma_semaphore, #tpu.memory_space<semaphore_mem>> -> memref<1x!tpu.dma_semaphore, #tpu.memory_space<semaphore_mem>>
    %58 = tpu.memref_squeeze %57 : memref<1x!tpu.dma_semaphore, #tpu.memory_space<semaphore_mem>> -> memref<!tpu.dma_semaphore, #tpu.memory_space<semaphore_mem>>
    tpu.enqueue_dma source(%55 : memref<1x32xf32, #tpu.memory_space<any>>) target(%56 : memref<1x32xf32, #tpu.memory_space<vmem>>) target_semaphore(%58 : memref<!tpu.dma_semaphore, #tpu.memory_space<semaphore_mem>>)
    %c0_i32_33 = arith.constant 0 : i32
    %c0_i32_34 = arith.constant 0 : i32
    %59 = tpu.memref_slice %arg3[%5, %c0_i32_34] : memref<50x32xf32, #tpu.memory_space<any>> -> memref<1x32xf32, #tpu.memory_space<any>>
    %c0_i32_35 = arith.constant 0 : i32
    %c0_i32_36 = arith.constant 0 : i32
    %60 = tpu.memref_slice %arg9[%c0_i32_35, %c0_i32_36] : memref<8x32xf32, #tpu.memory_space<vmem>> -> memref<1x32xf32, #tpu.memory_space<vmem>>
    %61 = tpu.memref_slice %arg10[%c0_i32_33] : memref<1x!tpu.dma_semaphore, #tpu.memory_space<semaphore_mem>> -> memref<1x!tpu.dma_semaphore, #tpu.memory_space<semaphore_mem>>
    %62 = tpu.memref_squeeze %61 : memref<1x!tpu.dma_semaphore, #tpu.memory_space<semaphore_mem>> -> memref<!tpu.dma_semaphore, #tpu.memory_space<semaphore_mem>>
    tpu.wait_dma2 semaphore(%62 : memref<!tpu.dma_semaphore, #tpu.memory_space<semaphore_mem>>) src(%59 : memref<1x32xf32, #tpu.memory_space<any>>) dst(%60 : memref<1x32xf32, #tpu.memory_space<vmem>>)
    %c0_i32_37 = arith.constant 0 : i32
    %c0_i32_38 = arith.constant 0 : i32
    %63 = tpu.memref_slice %arg3[%8, %c0_i32_38] : memref<50x32xf32, #tpu.memory_space<any>> -> memref<1x32xf32, #tpu.memory_space<any>>
    %c1_i32_39 = arith.constant 1 : i32
    %c0_i32_40 = arith.constant 0 : i32
    %64 = tpu.memref_slice %arg9[%c1_i32_39, %c0_i32_40] : memref<8x32xf32, #tpu.memory_space<vmem>> -> memref<1x32xf32, #tpu.memory_space<vmem>>
    %65 = tpu.memref_slice %arg10[%c0_i32_37] : memref<1x!tpu.dma_semaphore, #tpu.memory_space<semaphore_mem>> -> memref<1x!tpu.dma_semaphore, #tpu.memory_space<semaphore_mem>>
    %66 = tpu.memref_squeeze %65 : memref<1x!tpu.dma_semaphore, #tpu.memory_space<semaphore_mem>> -> memref<!tpu.dma_semaphore, #tpu.memory_space<semaphore_mem>>
    tpu.wait_dma2 semaphore(%66 : memref<!tpu.dma_semaphore, #tpu.memory_space<semaphore_mem>>) src(%63 : memref<1x32xf32, #tpu.memory_space<any>>) dst(%64 : memref<1x32xf32, #tpu.memory_space<vmem>>)
    %c0_i32_41 = arith.constant 0 : i32
    %c0_i32_42 = arith.constant 0 : i32
    %67 = tpu.memref_slice %arg3[%11, %c0_i32_42] : memref<50x32xf32, #tpu.memory_space<any>> -> memref<1x32xf32, #tpu.memory_space<any>>
    %c2_i32_43 = arith.constant 2 : i32
    %c0_i32_44 = arith.constant 0 : i32
    %68 = tpu.memref_slice %arg9[%c2_i32_43, %c0_i32_44] : memref<8x32xf32, #tpu.memory_space<vmem>> -> memref<1x32xf32, #tpu.memory_space<vmem>>
    %69 = tpu.memref_slice %arg10[%c0_i32_41] : memref<1x!tpu.dma_semaphore, #tpu.memory_space<semaphore_mem>> -> memref<1x!tpu.dma_semaphore, #tpu.memory_space<semaphore_mem>>
    %70 = tpu.memref_squeeze %69 : memref<1x!tpu.dma_semaphore, #tpu.memory_space<semaphore_mem>> -> memref<!tpu.dma_semaphore, #tpu.memory_space<semaphore_mem>>
    tpu.wait_dma2 semaphore(%70 : memref<!tpu.dma_semaphore, #tpu.memory_space<semaphore_mem>>) src(%67 : memref<1x32xf32, #tpu.memory_space<any>>) dst(%68 : memref<1x32xf32, #tpu.memory_space<vmem>>)
    %c0_i32_45 = arith.constant 0 : i32
    %c0_i32_46 = arith.constant 0 : i32
    %71 = tpu.memref_slice %arg3[%14, %c0_i32_46] : memref<50x32xf32, #tpu.memory_space<any>> -> memref<1x32xf32, #tpu.memory_space<any>>
    %c3_i32_47 = arith.constant 3 : i32
    %c0_i32_48 = arith.constant 0 : i32
    %72 = tpu.memref_slice %arg9[%c3_i32_47, %c0_i32_48] : memref<8x32xf32, #tpu.memory_space<vmem>> -> memref<1x32xf32, #tpu.memory_space<vmem>>
    %73 = tpu.memref_slice %arg10[%c0_i32_45] : memref<1x!tpu.dma_semaphore, #tpu.memory_space<semaphore_mem>> -> memref<1x!tpu.dma_semaphore, #tpu.memory_space<semaphore_mem>>
    %74 = tpu.memref_squeeze %73 : memref<1x!tpu.dma_semaphore, #tpu.memory_space<semaphore_mem>> -> memref<!tpu.dma_semaphore, #tpu.memory_space<semaphore_mem>>
    tpu.wait_dma2 semaphore(%74 : memref<!tpu.dma_semaphore, #tpu.memory_space<semaphore_mem>>) src(%71 : memref<1x32xf32, #tpu.memory_space<any>>) dst(%72 : memref<1x32xf32, #tpu.memory_space<vmem>>)
    %c0_i32_49 = arith.constant 0 : i32
    %c0_i32_50 = arith.constant 0 : i32
    %75 = tpu.memref_slice %arg3[%17, %c0_i32_50] : memref<50x32xf32, #tpu.memory_space<any>> -> memref<1x32xf32, #tpu.memory_space<any>>
    %c4_i32_51 = arith.constant 4 : i32
    %c0_i32_52 = arith.constant 0 : i32
    %76 = tpu.memref_slice %arg9[%c4_i32_51, %c0_i32_52] : memref<8x32xf32, #tpu.memory_space<vmem>> -> memref<1x32xf32, #tpu.memory_space<vmem>>
    %77 = tpu.memref_slice %arg10[%c0_i32_49] : memref<1x!tpu.dma_semaphore, #tpu.memory_space<semaphore_mem>> -> memref<1x!tpu.dma_semaphore, #tpu.memory_space<semaphore_mem>>
    %78 = tpu.memref_squeeze %77 : memref<1x!tpu.dma_semaphore, #tpu.memory_space<semaphore_mem>> -> memref<!tpu.dma_semaphore, #tpu.memory_space<semaphore_mem>>
    tpu.wait_dma2 semaphore(%78 : memref<!tpu.dma_semaphore, #tpu.memory_space<semaphore_mem>>) src(%75 : memref<1x32xf32, #tpu.memory_space<any>>) dst(%76 : memref<1x32xf32, #tpu.memory_space<vmem>>)
    %c0_i32_53 = arith.constant 0 : i32
    %c0_i32_54 = arith.constant 0 : i32
    %79 = tpu.memref_slice %arg3[%20, %c0_i32_54] : memref<50x32xf32, #tpu.memory_space<any>> -> memref<1x32xf32, #tpu.memory_space<any>>
    %c5_i32_55 = arith.constant 5 : i32
    %c0_i32_56 = arith.constant 0 : i32
    %80 = tpu.memref_slice %arg9[%c5_i32_55, %c0_i32_56] : memref<8x32xf32, #tpu.memory_space<vmem>> -> memref<1x32xf32, #tpu.memory_space<vmem>>
    %81 = tpu.memref_slice %arg10[%c0_i32_53] : memref<1x!tpu.dma_semaphore, #tpu.memory_space<semaphore_mem>> -> memref<1x!tpu.dma_semaphore, #tpu.memory_space<semaphore_mem>>
    %82 = tpu.memref_squeeze %81 : memref<1x!tpu.dma_semaphore, #tpu.memory_space<semaphore_mem>> -> memref<!tpu.dma_semaphore, #tpu.memory_space<semaphore_mem>>
    tpu.wait_dma2 semaphore(%82 : memref<!tpu.dma_semaphore, #tpu.memory_space<semaphore_mem>>) src(%79 : memref<1x32xf32, #tpu.memory_space<any>>) dst(%80 : memref<1x32xf32, #tpu.memory_space<vmem>>)
    %c0_i32_57 = arith.constant 0 : i32
    %c0_i32_58 = arith.constant 0 : i32
    %83 = tpu.memref_slice %arg3[%23, %c0_i32_58] : memref<50x32xf32, #tpu.memory_space<any>> -> memref<1x32xf32, #tpu.memory_space<any>>
    %c6_i32_59 = arith.constant 6 : i32
    %c0_i32_60 = arith.constant 0 : i32
    %84 = tpu.memref_slice %arg9[%c6_i32_59, %c0_i32_60] : memref<8x32xf32, #tpu.memory_space<vmem>> -> memref<1x32xf32, #tpu.memory_space<vmem>>
    %85 = tpu.memref_slice %arg10[%c0_i32_57] : memref<1x!tpu.dma_semaphore, #tpu.memory_space<semaphore_mem>> -> memref<1x!tpu.dma_semaphore, #tpu.memory_space<semaphore_mem>>
    %86 = tpu.memref_squeeze %85 : memref<1x!tpu.dma_semaphore, #tpu.memory_space<semaphore_mem>> -> memref<!tpu.dma_semaphore, #tpu.memory_space<semaphore_mem>>
    tpu.wait_dma2 semaphore(%86 : memref<!tpu.dma_semaphore, #tpu.memory_space<semaphore_mem>>) src(%83 : memref<1x32xf32, #tpu.memory_space<any>>) dst(%84 : memref<1x32xf32, #tpu.memory_space<vmem>>)
    %c0_i32_61 = arith.constant 0 : i32
    %c0_i32_62 = arith.constant 0 : i32
    %87 = tpu.memref_slice %arg3[%26, %c0_i32_62] : memref<50x32xf32, #tpu.memory_space<any>> -> memref<1x32xf32, #tpu.memory_space<any>>
    %c7_i32_63 = arith.constant 7 : i32
    %c0_i32_64 = arith.constant 0 : i32
    %88 = tpu.memref_slice %arg9[%c7_i32_63, %c0_i32_64] : memref<8x32xf32, #tpu.memory_space<vmem>> -> memref<1x32xf32, #tpu.memory_space<vmem>>
    %89 = tpu.memref_slice %arg10[%c0_i32_61] : memref<1x!tpu.dma_semaphore, #tpu.memory_space<semaphore_mem>> -> memref<1x!tpu.dma_semaphore, #tpu.memory_space<semaphore_mem>>
    %90 = tpu.memref_squeeze %89 : memref<1x!tpu.dma_semaphore, #tpu.memory_space<semaphore_mem>> -> memref<!tpu.dma_semaphore, #tpu.memory_space<semaphore_mem>>
    tpu.wait_dma2 semaphore(%90 : memref<!tpu.dma_semaphore, #tpu.memory_space<semaphore_mem>>) src(%87 : memref<1x32xf32, #tpu.memory_space<any>>) dst(%88 : memref<1x32xf32, #tpu.memory_space<vmem>>)
    %c0 = arith.constant 0 : index
    %c0_65 = arith.constant 0 : index
    %91 = vector.load %arg9[%c0, %c0_65] : memref<8x32xf32, #tpu.memory_space<vmem>>, vector<8x32xf32>
    %c0_66 = arith.constant 0 : index
    %c0_67 = arith.constant 0 : index
    %92 = vector.load %arg4[%c0_66, %c0_67] : memref<8x32xf32, #tpu.memory_space<vmem>>, vector<8x32xf32>
    %c0_68 = arith.constant 0 : index
    %c0_69 = arith.constant 0 : index
    %c0_70 = arith.constant 0 : index
    %93 = vector.load %arg5[%c0_68, %c0_69, %c0_70] : memref<1x8x1xi32, #tpu.memory_space<vmem>>, vector<1x8x1xi32>
    %94 = vector.shape_cast %93 : vector<1x8x1xi32> to vector<8x1xi32>
    %cst = arith.constant 0.000000e+00 : f32
    %95 = vector.broadcast %cst : f32 to vector<8x32xf32>
    %c0_i32_71 = arith.constant 0 : i32
    %96 = vector.broadcast %c0_i32_71 : i32 to vector<8x1xi32>
    %97 = arith.cmpi eq, %94, %96 : vector<8x1xi32>
    %cst_72 = arith.constant 1.000000e+00 : f32
    %cst_73 = arith.constant 0.000000e+00 : f32
    %98 = vector.broadcast %cst_72 : f32 to vector<8x1xf32>
    %99 = vector.broadcast %cst_73 : f32 to vector<8x1xf32>
    %100 = arith.select %97, %98, %99 : vector<8x1xi1>, vector<8x1xf32>
    %c0_74 = arith.constant 0 : index
    %c0_75 = arith.constant 0 : index
    %101 = vector.load %arg6[%c0_74, %c0_75] : memref<2x32xf32, #tpu.memory_space<vmem>>, vector<1x32xf32>
    %102 = vector.broadcast %100 : vector<8x1xf32> to vector<8x32xf32>
    %103 = vector.broadcast %101 : vector<1x32xf32> to vector<8x32xf32>
    %104 = arith.mulf %102, %103 : vector<8x32xf32>
    %105 = arith.addf %95, %104 : vector<8x32xf32>
    %c1_i32_76 = arith.constant 1 : i32
    %106 = vector.broadcast %c1_i32_76 : i32 to vector<8x1xi32>
    %107 = arith.cmpi eq, %94, %106 : vector<8x1xi32>
    %cst_77 = arith.constant 1.000000e+00 : f32
    %cst_78 = arith.constant 0.000000e+00 : f32
    %108 = vector.broadcast %cst_77 : f32 to vector<8x1xf32>
    %109 = vector.broadcast %cst_78 : f32 to vector<8x1xf32>
    %110 = arith.select %107, %108, %109 : vector<8x1xi1>, vector<8x1xf32>
    %c1 = arith.constant 1 : index
    %c0_79 = arith.constant 0 : index
    %111 = vector.load %arg6[%c1, %c0_79] : memref<2x32xf32, #tpu.memory_space<vmem>>, vector<1x32xf32>
    %112 = vector.broadcast %110 : vector<8x1xf32> to vector<8x32xf32>
    %113 = vector.broadcast %111 : vector<1x32xf32> to vector<8x32xf32>
    %114 = arith.mulf %112, %113 : vector<8x32xf32>
    %115 = arith.addf %105, %114 : vector<8x32xf32>
    %116 = arith.addf %91, %92 : vector<8x32xf32>
    %117 = arith.addf %116, %115 : vector<8x32xf32>
    %cst_80 = arith.constant dense<0.000000e+00> : vector<8xf32>
    %118 = vector.multi_reduction <add>, %117, %cst_80 [1] : vector<8x32xf32> to vector<8xf32>
    %119 = vector.shape_cast %118 : vector<8xf32> to vector<8x1xf32>
    %cst_81 = arith.constant 3.200000e+01 : f32
    %120 = vector.broadcast %cst_81 : f32 to vector<8x1xf32>
    %121 = arith.divf %119, %120 : vector<8x1xf32>
    %122 = vector.broadcast %121 : vector<8x1xf32> to vector<8x32xf32>
    %123 = arith.subf %117, %122 : vector<8x32xf32>
    %124 = arith.mulf %123, %123 : vector<8x32xf32>
    %cst_82 = arith.constant dense<0.000000e+00> : vector<8xf32>
    %125 = vector.multi_reduction <add>, %124, %cst_82 [1] : vector<8x32xf32> to vector<8xf32>
    %126 = vector.shape_cast %125 : vector<8xf32> to vector<8x1xf32>
    %cst_83 = arith.constant 3.200000e+01 : f32
    %127 = vector.broadcast %cst_83 : f32 to vector<8x1xf32>
    %128 = arith.divf %126, %127 : vector<8x1xf32>
    %cst_84 = arith.constant 9.99999974E-6 : f32
    %129 = vector.broadcast %cst_84 : f32 to vector<8x1xf32>
    %130 = arith.addf %128, %129 : vector<8x1xf32>
    %131 = math.rsqrt %130 : vector<8x1xf32>
    %c0_85 = arith.constant 0 : index
    %c0_86 = arith.constant 0 : index
    %132 = vector.load %arg7[%c0_85, %c0_86] : memref<2x32xf32, #tpu.memory_space<vmem>>, vector<1x32xf32>
    %c1_87 = arith.constant 1 : index
    %c0_88 = arith.constant 0 : index
    %133 = vector.load %arg7[%c1_87, %c0_88] : memref<2x32xf32, #tpu.memory_space<vmem>>, vector<1x32xf32>
    %134 = vector.broadcast %131 : vector<8x1xf32> to vector<8x32xf32>
    %135 = arith.mulf %123, %134 : vector<8x32xf32>
    %136 = vector.broadcast %132 : vector<1x32xf32> to vector<8x32xf32>
    %137 = arith.mulf %135, %136 : vector<8x32xf32>
    %138 = vector.broadcast %133 : vector<1x32xf32> to vector<8x32xf32>
    %139 = arith.addf %137, %138 : vector<8x32xf32>
    %c0_89 = arith.constant 0 : index
    %c0_90 = arith.constant 0 : index
    %c0_91 = arith.constant 0 : index
    %140 = vector.load %arg8[%c0_89, %c0_90, %c0_91] : memref<1x8x32xf32, #tpu.memory_space<vmem>>, vector<1x8x32xf32>
    %141 = vector.shape_cast %140 : vector<1x8x32xf32> to vector<8x32xf32>
    %142 = vector.shape_cast %139 : vector<8x32xf32> to vector<1x8x32xf32>
    tpu.vector_store %arg8[%c0_89, %c0_90, %c0_91], %142 {strides = array<i32>} : memref<1x8x32xf32, #tpu.memory_space<vmem>>, vector<1x8x32xf32>,
    return
  }
  func.func @transform_1(%arg0: i32, %arg1: i32, %arg2: memref<16xi32, #tpu.memory_space<smem>>) -> (i32, i32) {
    %c0_i32 = arith.constant 0 : i32
    %c0_i32_0 = arith.constant 0 : i32
    return %arg1, %c0_i32 : i32, i32
  }
  func.func @transform_2(%arg0: i32, %arg1: i32, %arg2: memref<16xi32, #tpu.memory_space<smem>>) -> (i32, i32, i32) {
    %c0_i32 = arith.constant 0 : i32
    %c0_i32_0 = arith.constant 0 : i32
    return %arg0, %arg1, %c0_i32 : i32, i32, i32
  }
  func.func @transform_3(%arg0: i32, %arg1: i32, %arg2: memref<16xi32, #tpu.memory_space<smem>>) -> (i32, i32) {
    %c0_i32 = arith.constant 0 : i32
    %c0_i32_0 = arith.constant 0 : i32
    %c0_i32_1 = arith.constant 0 : i32
    return %c0_i32, %c0_i32_0 : i32, i32
  }
  func.func @transform_4(%arg0: i32, %arg1: i32, %arg2: memref<16xi32, #tpu.memory_space<smem>>) -> (i32, i32) {
    %c0_i32 = arith.constant 0 : i32
    %c0_i32_0 = arith.constant 0 : i32
    %c0_i32_1 = arith.constant 0 : i32
    return %c0_i32, %c0_i32_0 : i32, i32
  }
  func.func @transform_5(%arg0: i32, %arg1: i32, %arg2: memref<16xi32, #tpu.memory_space<smem>>) -> (i32, i32, i32) {
    %c0_i32 = arith.constant 0 : i32
    %c0_i32_0 = arith.constant 0 : i32
    return %arg0, %arg1, %c0_i32 : i32, i32, i32
  }
}

</mosaic_0001>

<llo_original>
// kernel: tpu_custom_call.1
$region0: #{tpu_custom_call.1}
  #allocation0 [shape = 'u32[]', space=smem, size = 0x4, offset = 0x4, fixed_abs, tag = 'smem constant byte address 0x4 - core index']
  #allocation1 [shape = 'u32[144,128]{1,0:T(1,128)}', space=vmem, size = 0x12000, scoped, tag = 'internal scratch']
  #allocation2 [shape = 'f32[8,32]{1,0:T(8,128)}', space=vmem, size = 0x1000, scoped, tag = 'scratch operand']
  #allocation3 [shape = 's32[1]{0}', space=sflag, size = 0x4, scoped, tag = 'scratch operand']
  #allocation4 [shape = 's32[1]{0}', space=sflag, size = 0x4, scoped, tag = 'scoped memory for tpu_custom_call.1']
  #allocation5 [shape = 'u8[512]{0}', space=smem, size = 0x200, scoped, tag = 'prefetched SMEM operand 0']
  #allocation8 [shape = 's32[]', space=sflag, size = 0x4, offset = 0, fixed_abs, tag = 'sflag constant byte address 0x0 - dummy sync flag']
  #allocation9 [shape = 's32[]', space=sflag, size = 0x4, offset = 0, fixed_abs, tag = 'sflag constant byte address 0x0 - dummy sync flag']
  #allocation10 [shape = 's32[]', space=sflag, size = 0x4, offset = 0, fixed_abs, tag = 'sflag constant byte address 0x0 - dummy sync flag']
  #allocation11 [shape = 's32[]', space=sflag, size = 0x4, offset = 0, fixed_abs, tag = 'sflag constant byte address 0x0 - dummy sync flag']
  #allocation12 [shape = 's32[]', space=sflag, size = 0x4, offset = 0, fixed_abs, tag = 'sflag constant byte address 0x0 - dummy sync flag']
  #allocation13 [shape = 's32[]', space=sflag, size = 0x4, offset = 0, fixed_abs, tag = 'sflag constant byte address 0x0 - dummy sync flag']
  #allocation14 [shape = 's32[]', space=sflag, size = 0x4, offset = 0, fixed_abs, tag = 'sflag constant byte address 0x0 - dummy sync flag']
  #allocation15 [shape = 's32[]', space=sflag, size = 0x4, offset = 0, fixed_abs, tag = 'sflag constant byte address 0x0 - dummy sync flag']
  %s0 = inlined_call_operand.vmem [shape: s32[16], index: 0, kind: input, shape index: {}]
  %s1 = inlined_call_operand.vmem [shape: f32[50,32], index: 1, kind: input, shape index: {}]
  %s2 = inlined_call_operand.vmem [shape: f32[8,32], index: 2, kind: input, shape index: {}]
  %s3 = inlined_call_operand.vmem [shape: s32[2,8,1], index: 3, kind: input, shape index: {}]
  %s4 = inlined_call_operand.vmem [shape: f32[2,32], index: 4, kind: input, shape index: {}]
  %s5 = inlined_call_operand.vmem [shape: f32[2,32], index: 5, kind: input, shape index: {}]
  %s6 = inlined_call_operand.hbm [shape: f32[2,8,32], index: 6, kind: output, shape index: {}]
  %s7 = sld [smem:[#allocation0]]
  $region289: #{tpu_custom_call.1} parent=0
    _
  %s9 = ssub.s32 1, %s7
  %s10 = scalar_select 0, %s9, %s7
  %s11 = sshll.u32 %s0, 4
  %s12 = int_to_ptr.vmem [resolvable:$true] %s11
  %14 = dma.vmem_to_smem %s12, 16, [#allocation5], [#allocation4]
  %15 = dma.done [#allocation4], 16
  %16 = sfence
  $region1: #{tpu_custom_call.1} parent=0
    #allocation6 [shape = 'u8[8192]{0}', space=vmem, size = 0x2000, scoped, tag = 'output window, operand 0']
    #allocation7 [shape = 's32[2]{0}', space=sflag, size = 0x8, scoped, tag = 'scoped memory for tpu_custom_call.1']
    %17 = vsyncpa [#allocation7], 0
    %s18 = scalar_lea.sflag [#allocation7], 1
    %19 = vsyncpa %s18, 0
    loop: start=0, step=1, limit=4
    $region2: #{tpu_custom_call.1} parent=1 // loop_pre_header
      _
    $region3: #{tpu_custom_call.1} parent=1 // loop_header
      %s21 = sphi 0, %s25
      %p22 = scmp.ge.s32.totalorder %s21, 4
      %s28 = sphi 0, %s40
      %s29 = sphi 0, %s36
      %s30 = sphi 0, %s28
      %s31 = sphi 0, %s29
      %s32 = sphi 0, %s30
      %s33 = sphi 0, %s31
      %s43 = sphi 0, %s45
      %s46 = sphi 0, %s43
      %s47 = sphi 0, %s46
      %s63 = sphi 0, %s47
      %s71 = sphi 0, %s73
      %s74 = sphi 0, %s71
      %s75 = sphi 0, %s74
      %s91 = sphi 0, %s75
      %s95 = sphi 0, %s95
      %s97 = sphi 0, %s95
      %s98 = sphi 0, %s97
      %s112 = sphi 0, %s98
      %s116 = sphi 0, %s116
      %s118 = sphi 0, %s116
      %s119 = sphi 0, %s118
      %s133 = sphi 0, %s119
      %s141 = sphi 0, %s143
      %s144 = sphi 0, %s141
      %s145 = sphi 0, %s144
      %s161 = sphi 0, %s145
    $region4: #{tpu_custom_call.1} parent=1 // loop_header_branch
      %24 = sbr.rel (%p22) target = $region8
    $region5: #{tpu_custom_call.1} parent=1 // loop_body
      %s26 = ssub.s32 %s21, 1
      %s27 = ssub.s32 %s21, 2
      %s34 = sadd.s32 1, %s29
      %p35 = scmp.ge.s32.totalorder %s34, 1
      %s36 = scalar_select %p35, 0, %s34
      %s37 = sadd.s32 1, %s28
      %s38 = scalar_select %p35, %s37, %s28
      %p39 = scmp.ge.s32.totalorder %s38, 2
      %s40 = scalar_select %p39, 0, %s38
      %s41 = ssub.s32 %s29, %s36
      %p42 = scmp.eq.s32.totalorder %s41, 0
      %s44 = sadd.s32 %s43, 1
      %s45 = scalar_select %p42, %s43, %s44
      %p48 = pneg %p42
      %p49 = scmp.eq.s32.totalorder %s21, 1
      %p50 = por %p48, %p49
      %p51 = scmp.ne.s32.totalorder %s43, %s46
      %p52 = scmp.eq.s32.totalorder %s21, 0
      %p53 = por %p51, %p52
      %p54 = scmp.ne.s32.totalorder %s43, %s46
      %p55 = scmp.eq.s32.totalorder %s26, 1
      %p56 = por %p54, %p55
      %p57 = scmp.ne.s32.totalorder %s46, %s47
      %p58 = scmp.eq.s32.totalorder %s26, 0
      %p59 = por %p57, %p58
      %p60 = scmp.ne.s32.totalorder %s46, %s47
      %p61 = scmp.eq.s32.totalorder %s27, 1
      %p62 = por %p60, %p61
      %p64 = scmp.ne.s32.totalorder %s47, %s63
      %p65 = scmp.eq.s32.totalorder %s27, 0
      %p66 = por %p64, %p65
      %s67 = ssub.s32 %s28, %s40
      %s68 = ssub.s32 %s29, %s36
      %s69 = sor.u32 %s67, %s68
      %p70 = scmp.eq.s32.totalorder %s69, 0
      %s72 = sadd.s32 %s71, 1
      %s73 = scalar_select %p70, %s71, %s72
      %p76 = pneg %p70
      %p77 = scmp.eq.s32.totalorder %s21, 1
      %p78 = por %p76, %p77
      %p79 = scmp.ne.s32.totalorder %s71, %s74
      %p80 = scmp.eq.s32.totalorder %s21, 0
      %p81 = por %p79, %p80
      %p82 = scmp.ne.s32.totalorder %s71, %s74
      %p83 = scmp.eq.s32.totalorder %s26, 1
      %p84 = por %p82, %p83
      %p85 = scmp.ne.s32.totalorder %s74, %s75
      %p86 = scmp.eq.s32.totalorder %s26, 0
      %p87 = por %p85, %p86
      %p88 = scmp.ne.s32.totalorder %s74, %s75
      %p89 = scmp.eq.s32.totalorder %s27, 1
      %p90 = por %p88, %p89
      %p92 = scmp.ne.s32.totalorder %s75, %s91
      %p93 = scmp.eq.s32.totalorder %s27, 0
      %p94 = por %p92, %p93
      %s96 = sadd.s32 %s95, 1
      %p99 = scmp.eq.s32.totalorder %s21, 1
      %p100 = scmp.ne.s32.totalorder %s95, %s97
      %p101 = scmp.eq.s32.totalorder %s21, 0
      %p102 = por %p100, %p101
      %p103 = scmp.ne.s32.totalorder %s95, %s97
      %p104 = scmp.eq.s32.totalorder %s26, 1
      %p105 = por %p103, %p104
      %p106 = scmp.ne.s32.totalorder %s97, %s98
      %p107 = scmp.eq.s32.totalorder %s26, 0
      %p108 = por %p106, %p107
      %p109 = scmp.ne.s32.totalorder %s97, %s98
      %p110 = scmp.eq.s32.totalorder %s27, 1
      %p111 = por %p109, %p110
      %p113 = scmp.ne.s32.totalorder %s98, %s112
      %p114 = scmp.eq.s32.totalorder %s27, 0
      %p115 = por %p113, %p114
      %s117 = sadd.s32 %s116, 1
      %p120 = scmp.eq.s32.totalorder %s21, 1
      %p121 = scmp.ne.s32.totalorder %s116, %s118
      %p122 = scmp.eq.s32.totalorder %s21, 0
      %p123 = por %p121, %p122
      %p124 = scmp.ne.s32.totalorder %s116, %s118
      %p125 = scmp.eq.s32.totalorder %s26, 1
      %p126 = por %p124, %p125
      %p127 = scmp.ne.s32.totalorder %s118, %s119
      %p128 = scmp.eq.s32.totalorder %s26, 0
      %p129 = por %p127, %p128
      %p130 = scmp.ne.s32.totalorder %s118, %s119
      %p131 = scmp.eq.s32.totalorder %s27, 1
      %p132 = por %p130, %p131
      %p134 = scmp.ne.s32.totalorder %s119, %s133
      %p135 = scmp.eq.s32.totalorder %s27, 0
      %p136 = por %p134, %p135
      %s137 = ssub.s32 %s28, %s40
      %s138 = ssub.s32 %s29, %s36
      %s139 = sor.u32 %s137, %s138
      %p140 = scmp.eq.s32.totalorder %s139, 0
      %s142 = sadd.s32 %s141, 1
      %s143 = scalar_select %p140, %s141, %s142
      %p146 = pneg %p140
      %p147 = scmp.eq.s32.totalorder %s21, 1
      %p148 = por %p146, %p147
      %p149 = scmp.ne.s32.totalorder %s141, %s144
      %p150 = scmp.eq.s32.totalorder %s21, 0
      %p151 = por %p149, %p150
      %p152 = scmp.ne.s32.totalorder %s141, %s144
      %p153 = scmp.eq.s32.totalorder %s26, 1
      %p154 = por %p152, %p153
      %p155 = scmp.ne.s32.totalorder %s144, %s145
      %p156 = scmp.eq.s32.totalorder %s26, 0
      %p157 = por %p155, %p156
      %p158 = scmp.ne.s32.totalorder %s144, %s145
      %p159 = scmp.eq.s32.totalorder %s27, 1
      %p160 = por %p158, %p159
      %p162 = scmp.ne.s32.totalorder %s145, %s161
      %p163 = scmp.eq.s32.totalorder %s27, 0
      %p164 = por %p162, %p163
      %p165 = scmp.le.s32.totalorder 1, %s21
      %p166 = scmp.lt.s32.totalorder %s21, 3
      %p167 = pnand %p165, %p166
      %p168 = pneg %p167
      // Predicated region
      $region9: #{tpu_custom_call.1} parent=5 // pred_check
        _
      $region10: #{tpu_custom_call.1} parent=5 // pred_check_branch
        %170 = sbr.rel (%p167) target = $region12
      $region11: #{tpu_custom_call.1} parent=5 // pred_region
        %s171 = ssub.s32 %s21, 1
        // Predicated region
        $region13: #{tpu_custom_call.1} parent=11 // pred_check
          %p172 = pneg %p59
        $region14: #{tpu_custom_call.1} parent=11 // pred_check_branch
          %174 = sbr.rel (%p172) target = $region16
        $region15: #{tpu_custom_call.1} parent=11 // pred_region
          %p175 = scmp.lt.s32.totalorder %s31, 0
          %s176 = scalar_select %p175, %s31, 0
          %s177 = smul.addr %s176, 8
          %s178 = scalar_lea.vmem %s2, %s177
        $region16: #{tpu_custom_call.1} parent=11 // pred_fallthru
          _
        // Predicated region
        $region17: #{tpu_custom_call.1} parent=11 // pred_check
          %p179 = pneg %p108
        $region18: #{tpu_custom_call.1} parent=11 // pred_check_branch
          %181 = sbr.rel (%p179) target = $region20
        $region19: #{tpu_custom_call.1} parent=11 // pred_region
          _
        $region20: #{tpu_custom_call.1} parent=11 // pred_fallthru
          _
        // Predicated region
        $region21: #{tpu_custom_call.1} parent=11 // pred_check
          %p182 = pneg %p129
        $region22: #{tpu_custom_call.1} parent=11 // pred_check_branch
          %184 = sbr.rel (%p182) target = $region24
        $region23: #{tpu_custom_call.1} parent=11 // pred_region
          _
        $region24: #{tpu_custom_call.1} parent=11 // pred_fallthru
          _
      $region12: #{tpu_custom_call.1} parent=5 // pred_fallthru
        _
      %p185 = scmp.lt.s32.totalorder %s21, 2
      // Predicated region
      $region25: #{tpu_custom_call.1} parent=5 // pred_check
        %p186 = pneg %p185
      $region26: #{tpu_custom_call.1} parent=5 // pred_check_branch
        %188 = sbr.rel (%p186) target = $region28
      $region27: #{tpu_custom_call.1} parent=5 // pred_region
        // Predicated region
        $region29: #{tpu_custom_call.1} parent=27 // pred_check
          %p189 = pneg %p81
        $region30: #{tpu_custom_call.1} parent=27 // pred_check_branch
          %191 = sbr.rel (%p189) target = $region32
        $region31: #{tpu_custom_call.1} parent=27 // pred_region
          %p192 = scmp.lt.s32.totalorder %s28, 1
          %s193 = scalar_select %p192, %s28, 1
          %p194 = scmp.lt.s32.totalorder %s29, 0
          %s195 = scalar_select %p194, %s29, 0
          %s196 = sadd.s32 %s195, %s193
          %s197 = smul.addr %s196, 8
          %s198 = scalar_lea.vmem %s3, %s197
        $region32: #{tpu_custom_call.1} parent=27 // pred_fallthru
          _
      $region28: #{tpu_custom_call.1} parent=5 // pred_fallthru
        _
      %p199 = scmp.le.s32.totalorder 1, %s21
      %p200 = scmp.lt.s32.totalorder %s21, 3
      %p201 = pnand %p199, %p200
      %p202 = pneg %p201
      // Predicated region
      $region33: #{tpu_custom_call.1} parent=5 // pred_check
        _
      $region34: #{tpu_custom_call.1} parent=5 // pred_check_branch
        %204 = sbr.rel (%p201) target = $region36
      $region35: #{tpu_custom_call.1} parent=5 // pred_region
        %s205 = ssub.s32 %s21, 1
        %p206 = scmp.lt.s32.totalorder %s31, 0
        %s207 = scalar_select %p206, %s31, 0
        %s208 = smul.addr %s207, 8
        %s209 = scalar_lea.vmem %s2, %s208
        %p210 = pneg %p59
        %p211 = pneg %p56
        %p212 = scmp.lt.s32.totalorder %s30, 1
        %s213 = scalar_select %p212, %s30, 1
        %p214 = scmp.lt.s32.totalorder %s31, 0
        %s215 = scalar_select %p214, %s31, 0
        %s216 = sadd.s32 %s215, %s213
        %s217 = smul.addr %s216, 8
        %s218 = scalar_lea.vmem %s3, %s217
        %p219 = pneg %p87
        %p220 = pneg %p84
        %p221 = pneg %p108
        %p222 = pneg %p105
        %p223 = pneg %p129
        %p224 = pneg %p126
        %p225 = pneg %p157
        %p226 = pneg %p154
        %s227 = sand.u32 %s144, 1
        %s228 = scalar_lea.sflag [#allocation7], %s227
        %s229 = sand.u32 %s144, 1
        %s230 = smul.addr %s229, 8
        %s231 = scalar_lea.vmem [#allocation6], %s230
        %p232 = scmp.lt.s32.totalorder %s31, 0
        %s233 = scalar_select %p232, %s31, 0
        %s234 = smul.addr %s233, 8
        %s235 = scalar_lea.vmem %s2, %s234
        %p236 = scmp.lt.s32.totalorder %s30, 1
        %s237 = scalar_select %p236, %s30, 1
        %p238 = scmp.lt.s32.totalorder %s31, 0
        %s239 = scalar_select %p238, %s31, 0
        %s240 = sadd.s32 %s239, %s237
        %s241 = smul.addr %s240, 8
        %s242 = scalar_lea.vmem %s3, %s241
        %s243 = smul.u32 %s30, 8
        %s244 = smul.u32 %s31, 8
        %s245 = sadd.s32 %s243, %s244
        %s246 = sld [smem:[#allocation5 + %s245]]
        %s247 = sadd.s32 %s245, 1
        %s248 = sld [smem:[#allocation5 + %s247]]
        %s249 = sadd.s32 %s245, 2
        %s250 = sld [smem:[#allocation5 + %s249]]
        %s251 = sadd.s32 %s245, 3
        %s252 = sld [smem:[#allocation5 + %s251]]
        %s253 = sadd.s32 %s245, 4
        %s254 = sld [smem:[#allocation5 + %s253]]
        %s255 = sadd.s32 %s245, 5
        %s256 = sld [smem:[#allocation5 + %s255]]
        %s257 = sadd.s32 %s245, 6
        %s258 = sld [smem:[#allocation5 + %s257]]
        %s259 = sadd.s32 %s245, 7
        %s260 = sld [smem:[#allocation5 + %s259]]
        %s261 = scalar_lea.vmem %s1, %s246
        %p263 = scmp.lt.u32.totalorder 1, 8
        %p264 = pneg %p263
        // Predicated region
        $region37: #{tpu_custom_call.1} parent=35 // pred_check
          _
        $region38: #{tpu_custom_call.1} parent=35 // pred_check_branch
          %266 = sbr.rel (%p263) target = $region40
        $region39: #{tpu_custom_call.1} parent=35 // pred_region
          %s281 = sand.u32 1, 7
          %p282 = scmp.eq.s32.totalorder %s281, 0
          %p283 = pneg %p282
          // Predicated region
          $region52: #{tpu_custom_call.1} parent=39 // pred_check
            _
          $region53: #{tpu_custom_call.1} parent=39 // pred_check_branch
            %285 = sbr.rel (%p282) target = $region55
          $region54: #{tpu_custom_call.1} parent=39 // pred_region
            %s286 = sand.u32 1, 7
            %s287 = ssub.s32 1, %s286
            %s288 = scalar_lea.vmem %s261, %s287
            %s289 = ssub.s32 1, %s286
            %s290 = scalar_lea.vmem [#allocation2], %s289
            %s291 = sshllo.u32 0, %s286
            loop: start=0, step=1, limit=1
            $region56: #{tpu_custom_call.1} parent=54 // loop_pre_header
              _
            $region57: #{tpu_custom_call.1} parent=54 // loop_header
              %s293 = sphi 0, %s297
              %p294 = scmp.ge.s32.totalorder %s293, 1
              %s298 = sphi %s288, %s288
              %s299 = sphi %s290, %s290
            $region58: #{tpu_custom_call.1} parent=54 // loop_header_branch
              %296 = sbr.rel (%p294) target = $region62
            $region59: #{tpu_custom_call.1} parent=54 // loop_body
              %v300 = vld [vmem:[%s298] sm:%s291]
              %301 = vst [vmem:[%s299] sm:%s291] %v300
            $region60: #{tpu_custom_call.1} parent=54 // loop_footer
              %s297 = sadd.s32 1, %s293
            $region61: #{tpu_custom_call.1} parent=54 // loop_footer_branch
              %292 = sbr.rel target = $region57
            $region62: #{tpu_custom_call.1} parent=54 // loop_exit
              _
          $region55: #{tpu_custom_call.1} parent=39 // pred_fallthru
            _
        $region40: #{tpu_custom_call.1} parent=35 // pred_fallthru
          _
        // Predicated region
        $region41: #{tpu_custom_call.1} parent=35 // pred_check
          %p267 = pneg %p263
        $region42: #{tpu_custom_call.1} parent=35 // pred_check_branch
          %269 = sbr.rel (%p267) target = $region44
        $region43: #{tpu_custom_call.1} parent=35 // pred_region
          %s270 = sshllo.u32 0, 1
          loop: start=0, step=1, limit=1
          $region45: #{tpu_custom_call.1} parent=43 // loop_pre_header
            _
          $region46: #{tpu_custom_call.1} parent=43 // loop_header
            %s272 = sphi 0, %s276
            %p273 = scmp.ge.s32.totalorder %s272, 1
            %s277 = sphi %s261, %s261
            %s278 = sphi [#allocation2], [#allocation2]
          $region47: #{tpu_custom_call.1} parent=43 // loop_header_branch
            %275 = sbr.rel (%p273) target = $region51
          $region48: #{tpu_custom_call.1} parent=43 // loop_body
            %v279 = vld [vmem:[%s277] sm:%s270]
            %280 = vst [vmem:[%s278] sm:%s270] %v279
          $region49: #{tpu_custom_call.1} parent=43 // loop_footer
            %s276 = sadd.s32 1, %s272
          $region50: #{tpu_custom_call.1} parent=43 // loop_footer_branch
            %271 = sbr.rel target = $region46
          $region51: #{tpu_custom_call.1} parent=43 // loop_exit
            _
        $region44: #{tpu_custom_call.1} parent=35 // pred_fallthru
          _
        // Predicated region
        $region63: #{tpu_custom_call.1} parent=35 // pred_check
          _
        $region64: #{tpu_custom_call.1} parent=35 // pred_check_branch
          %304 = sbr.rel (0) target = $region66
        $region65: #{tpu_custom_call.1} parent=35 // pred_region
          %305 = vsyncadd [#allocation3], 16
        $region66: #{tpu_custom_call.1} parent=35 // pred_fallthru
          _
        %s306 = scalar_lea.vmem %s1, %s248
        %s307 = scalar_lea.vmem [#allocation2], 1
        %p309 = scmp.lt.u32.totalorder 1, 8
        %p310 = pneg %p309
        // Predicated region
        $region67: #{tpu_custom_call.1} parent=35 // pred_check
          _
        $region68: #{tpu_custom_call.1} parent=35 // pred_check_branch
          %312 = sbr.rel (%p309) target = $region70
        $region69: #{tpu_custom_call.1} parent=35 // pred_region
          %s327 = sand.u32 1, 7
          %p328 = scmp.eq.s32.totalorder %s327, 0
          %p329 = pneg %p328
          // Predicated region
          $region82: #{tpu_custom_call.1} parent=69 // pred_check
            _
          $region83: #{tpu_custom_call.1} parent=69 // pred_check_branch
            %331 = sbr.rel (%p328) target = $region85
          $region84: #{tpu_custom_call.1} parent=69 // pred_region
            %s332 = sand.u32 1, 7
            %s333 = ssub.s32 1, %s332
            %s334 = scalar_lea.vmem %s306, %s333
            %s335 = ssub.s32 1, %s332
            %s336 = scalar_lea.vmem %s307, %s335 [#allocation2]
            %s337 = sshllo.u32 0, %s332
            loop: start=0, step=1, limit=1
            $region86: #{tpu_custom_call.1} parent=84 // loop_pre_header
              _
            $region87: #{tpu_custom_call.1} parent=84 // loop_header
              %s339 = sphi 0, %s343
              %p340 = scmp.ge.s32.totalorder %s339, 1
              %s344 = sphi %s334, %s334
              %s345 = sphi %s336, %s336
            $region88: #{tpu_custom_call.1} parent=84 // loop_header_branch
              %342 = sbr.rel (%p340) target = $region92
            $region89: #{tpu_custom_call.1} parent=84 // loop_body
              %v346 = vld [vmem:[%s344] sm:%s337]
              %347 = vst [vmem:[%s345] sm:%s337] %v346
            $region90: #{tpu_custom_call.1} parent=84 // loop_footer
              %s343 = sadd.s32 1, %s339
            $region91: #{tpu_custom_call.1} parent=84 // loop_footer_branch
              %338 = sbr.rel target = $region87
            $region92: #{tpu_custom_call.1} parent=84 // loop_exit
              _
          $region85: #{tpu_custom_call.1} parent=69 // pred_fallthru
            _
        $region70: #{tpu_custom_call.1} parent=35 // pred_fallthru
          _
        // Predicated region
        $region71: #{tpu_custom_call.1} parent=35 // pred_check
          %p313 = pneg %p309
        $region72: #{tpu_custom_call.1} parent=35 // pred_check_branch
          %315 = sbr.rel (%p313) target = $region74
        $region73: #{tpu_custom_call.1} parent=35 // pred_region
          %s316 = sshllo.u32 0, 1
          loop: start=0, step=1, limit=1
          $region75: #{tpu_custom_call.1} parent=73 // loop_pre_header
            _
          $region76: #{tpu_custom_call.1} parent=73 // loop_header
            %s318 = sphi 0, %s322
            %p319 = scmp.ge.s32.totalorder %s318, 1
            %s323 = sphi %s306, %s306
            %s324 = sphi %s307, %s307
          $region77: #{tpu_custom_call.1} parent=73 // loop_header_branch
            %321 = sbr.rel (%p319) target = $region81
          $region78: #{tpu_custom_call.1} parent=73 // loop_body
            %v325 = vld [vmem:[%s323] sm:%s316]
            %326 = vst [vmem:[%s324] sm:%s316] %v325
          $region79: #{tpu_custom_call.1} parent=73 // loop_footer
            %s322 = sadd.s32 1, %s318
          $region80: #{tpu_custom_call.1} parent=73 // loop_footer_branch
            %317 = sbr.rel target = $region76
          $region81: #{tpu_custom_call.1} parent=73 // loop_exit
            _
        $region74: #{tpu_custom_call.1} parent=35 // pred_fallthru
          _
        // Predicated region
        $region93: #{tpu_custom_call.1} parent=35 // pred_check
          _
        $region94: #{tpu_custom_call.1} parent=35 // pred_check_branch
          %350 = sbr.rel (0) target = $region96
        $region95: #{tpu_custom_call.1} parent=35 // pred_region
          %351 = vsyncadd [#allocation3], 16
        $region96: #{tpu_custom_call.1} parent=35 // pred_fallthru
          _
        %s352 = scalar_lea.vmem %s1, %s250
        %s353 = scalar_lea.vmem [#allocation2], 2
        %p355 = scmp.lt.u32.totalorder 1, 8
        %p356 = pneg %p355
        // Predicated region
        $region97: #{tpu_custom_call.1} parent=35 // pred_check
          _
        $region98: #{tpu_custom_call.1} parent=35 // pred_check_branch
          %358 = sbr.rel (%p355) target = $region100
        $region99: #{tpu_custom_call.1} parent=35 // pred_region
          %s373 = sand.u32 1, 7
          %p374 = scmp.eq.s32.totalorder %s373, 0
          %p375 = pneg %p374
          // Predicated region
          $region112: #{tpu_custom_call.1} parent=99 // pred_check
            _
          $region113: #{tpu_custom_call.1} parent=99 // pred_check_branch
            %377 = sbr.rel (%p374) target = $region115
          $region114: #{tpu_custom_call.1} parent=99 // pred_region
            %s378 = sand.u32 1, 7
            %s379 = ssub.s32 1, %s378
            %s380 = scalar_lea.vmem %s352, %s379
            %s381 = ssub.s32 1, %s378
            %s382 = scalar_lea.vmem %s353, %s381 [#allocation2]
            %s383 = sshllo.u32 0, %s378
            loop: start=0, step=1, limit=1
            $region116: #{tpu_custom_call.1} parent=114 // loop_pre_header
              _
            $region117: #{tpu_custom_call.1} parent=114 // loop_header
              %s385 = sphi 0, %s389
              %p386 = scmp.ge.s32.totalorder %s385, 1
              %s390 = sphi %s380, %s380
              %s391 = sphi %s382, %s382
            $region118: #{tpu_custom_call.1} parent=114 // loop_header_branch
              %388 = sbr.rel (%p386) target = $region122
            $region119: #{tpu_custom_call.1} parent=114 // loop_body
              %v392 = vld [vmem:[%s390] sm:%s383]
              %393 = vst [vmem:[%s391] sm:%s383] %v392
            $region120: #{tpu_custom_call.1} parent=114 // loop_footer
              %s389 = sadd.s32 1, %s385
            $region121: #{tpu_custom_call.1} parent=114 // loop_footer_branch
              %384 = sbr.rel target = $region117
            $region122: #{tpu_custom_call.1} parent=114 // loop_exit
              _
          $region115: #{tpu_custom_call.1} parent=99 // pred_fallthru
            _
        $region100: #{tpu_custom_call.1} parent=35 // pred_fallthru
          _
        // Predicated region
        $region101: #{tpu_custom_call.1} parent=35 // pred_check
          %p359 = pneg %p355
        $region102: #{tpu_custom_call.1} parent=35 // pred_check_branch
          %361 = sbr.rel (%p359) target = $region104
        $region103: #{tpu_custom_call.1} parent=35 // pred_region
          %s362 = sshllo.u32 0, 1
          loop: start=0, step=1, limit=1
          $region105: #{tpu_custom_call.1} parent=103 // loop_pre_header
            _
          $region106: #{tpu_custom_call.1} parent=103 // loop_header
            %s364 = sphi 0, %s368
            %p365 = scmp.ge.s32.totalorder %s364, 1
            %s369 = sphi %s352, %s352
            %s370 = sphi %s353, %s353
          $region107: #{tpu_custom_call.1} parent=103 // loop_header_branch
            %367 = sbr.rel (%p365) target = $region111
          $region108: #{tpu_custom_call.1} parent=103 // loop_body
            %v371 = vld [vmem:[%s369] sm:%s362]
            %372 = vst [vmem:[%s370] sm:%s362] %v371
          $region109: #{tpu_custom_call.1} parent=103 // loop_footer
            %s368 = sadd.s32 1, %s364
          $region110: #{tpu_custom_call.1} parent=103 // loop_footer_branch
            %363 = sbr.rel target = $region106
          $region111: #{tpu_custom_call.1} parent=103 // loop_exit
            _
        $region104: #{tpu_custom_call.1} parent=35 // pred_fallthru
          _
        // Predicated region
        $region123: #{tpu_custom_call.1} parent=35 // pred_check
          _
        $region124: #{tpu_custom_call.1} parent=35 // pred_check_branch
          %396 = sbr.rel (0) target = $region126
        $region125: #{tpu_custom_call.1} parent=35 // pred_region
          %397 = vsyncadd [#allocation3], 16
        $region126: #{tpu_custom_call.1} parent=35 // pred_fallthru
          _
        %s398 = scalar_lea.vmem %s1, %s252
        %s399 = scalar_lea.vmem [#allocation2], 3
        %p401 = scmp.lt.u32.totalorder 1, 8
        %p402 = pneg %p401
        // Predicated region
        $region127: #{tpu_custom_call.1} parent=35 // pred_check
          _
        $region128: #{tpu_custom_call.1} parent=35 // pred_check_branch
          %404 = sbr.rel (%p401) target = $region130
        $region129: #{tpu_custom_call.1} parent=35 // pred_region
          %s419 = sand.u32 1, 7
          %p420 = scmp.eq.s32.totalorder %s419, 0
          %p421 = pneg %p420
          // Predicated region
          $region142: #{tpu_custom_call.1} parent=129 // pred_check
            _
          $region143: #{tpu_custom_call.1} parent=129 // pred_check_branch
            %423 = sbr.rel (%p420) target = $region145
          $region144: #{tpu_custom_call.1} parent=129 // pred_region
            %s424 = sand.u32 1, 7
            %s425 = ssub.s32 1, %s424
            %s426 = scalar_lea.vmem %s398, %s425
            %s427 = ssub.s32 1, %s424
            %s428 = scalar_lea.vmem %s399, %s427 [#allocation2]
            %s429 = sshllo.u32 0, %s424
            loop: start=0, step=1, limit=1
            $region146: #{tpu_custom_call.1} parent=144 // loop_pre_header
              _
            $region147: #{tpu_custom_call.1} parent=144 // loop_header
              %s431 = sphi 0, %s435
              %p432 = scmp.ge.s32.totalorder %s431, 1
              %s436 = sphi %s426, %s426
              %s437 = sphi %s428, %s428
            $region148: #{tpu_custom_call.1} parent=144 // loop_header_branch
              %434 = sbr.rel (%p432) target = $region152
            $region149: #{tpu_custom_call.1} parent=144 // loop_body
              %v438 = vld [vmem:[%s436] sm:%s429]
              %439 = vst [vmem:[%s437] sm:%s429] %v438
            $region150: #{tpu_custom_call.1} parent=144 // loop_footer
              %s435 = sadd.s32 1, %s431
            $region151: #{tpu_custom_call.1} parent=144 // loop_footer_branch
              %430 = sbr.rel target = $region147
            $region152: #{tpu_custom_call.1} parent=144 // loop_exit
              _
          $region145: #{tpu_custom_call.1} parent=129 // pred_fallthru
            _
        $region130: #{tpu_custom_call.1} parent=35 // pred_fallthru
          _
        // Predicated region
        $region131: #{tpu_custom_call.1} parent=35 // pred_check
          %p405 = pneg %p401
        $region132: #{tpu_custom_call.1} parent=35 // pred_check_branch
          %407 = sbr.rel (%p405) target = $region134
        $region133: #{tpu_custom_call.1} parent=35 // pred_region
          %s408 = sshllo.u32 0, 1
          loop: start=0, step=1, limit=1
          $region135: #{tpu_custom_call.1} parent=133 // loop_pre_header
            _
          $region136: #{tpu_custom_call.1} parent=133 // loop_header
            %s410 = sphi 0, %s414
            %p411 = scmp.ge.s32.totalorder %s410, 1
            %s415 = sphi %s398, %s398
            %s416 = sphi %s399, %s399
          $region137: #{tpu_custom_call.1} parent=133 // loop_header_branch
            %413 = sbr.rel (%p411) target = $region141
          $region138: #{tpu_custom_call.1} parent=133 // loop_body
            %v417 = vld [vmem:[%s415] sm:%s408]
            %418 = vst [vmem:[%s416] sm:%s408] %v417
          $region139: #{tpu_custom_call.1} parent=133 // loop_footer
            %s414 = sadd.s32 1, %s410
          $region140: #{tpu_custom_call.1} parent=133 // loop_footer_branch
            %409 = sbr.rel target = $region136
          $region141: #{tpu_custom_call.1} parent=133 // loop_exit
            _
        $region134: #{tpu_custom_call.1} parent=35 // pred_fallthru
          _
        // Predicated region
        $region153: #{tpu_custom_call.1} parent=35 // pred_check
          _
        $region154: #{tpu_custom_call.1} parent=35 // pred_check_branch
          %442 = sbr.rel (0) target = $region156
        $region155: #{tpu_custom_call.1} parent=35 // pred_region
          %443 = vsyncadd [#allocation3], 16
        $region156: #{tpu_custom_call.1} parent=35 // pred_fallthru
          _
        %s444 = scalar_lea.vmem %s1, %s254
        %s445 = scalar_lea.vmem [#allocation2], 4
        %p447 = scmp.lt.u32.totalorder 1, 8
        %p448 = pneg %p447
        // Predicated region
        $region157: #{tpu_custom_call.1} parent=35 // pred_check
          _
        $region158: #{tpu_custom_call.1} parent=35 // pred_check_branch
          %450 = sbr.rel (%p447) target = $region160
        $region159: #{tpu_custom_call.1} parent=35 // pred_region
          %s465 = sand.u32 1, 7
          %p466 = scmp.eq.s32.totalorder %s465, 0
          %p467 = pneg %p466
          // Predicated region
          $region172: #{tpu_custom_call.1} parent=159 // pred_check
            _
          $region173: #{tpu_custom_call.1} parent=159 // pred_check_branch
            %469 = sbr.rel (%p466) target = $region175
          $region174: #{tpu_custom_call.1} parent=159 // pred_region
            %s470 = sand.u32 1, 7
            %s471 = ssub.s32 1, %s470
            %s472 = scalar_lea.vmem %s444, %s471
            %s473 = ssub.s32 1, %s470
            %s474 = scalar_lea.vmem %s445, %s473 [#allocation2]
            %s475 = sshllo.u32 0, %s470
            loop: start=0, step=1, limit=1
            $region176: #{tpu_custom_call.1} parent=174 // loop_pre_header
              _
            $region177: #{tpu_custom_call.1} parent=174 // loop_header
              %s477 = sphi 0, %s481
              %p478 = scmp.ge.s32.totalorder %s477, 1
              %s482 = sphi %s472, %s472
              %s483 = sphi %s474, %s474
            $region178: #{tpu_custom_call.1} parent=174 // loop_header_branch
              %480 = sbr.rel (%p478) target = $region182
            $region179: #{tpu_custom_call.1} parent=174 // loop_body
              %v484 = vld [vmem:[%s482] sm:%s475]
              %485 = vst [vmem:[%s483] sm:%s475] %v484
            $region180: #{tpu_custom_call.1} parent=174 // loop_footer
              %s481 = sadd.s32 1, %s477
            $region181: #{tpu_custom_call.1} parent=174 // loop_footer_branch
              %476 = sbr.rel target = $region177
            $region182: #{tpu_custom_call.1} parent=174 // loop_exit
              _
          $region175: #{tpu_custom_call.1} parent=159 // pred_fallthru
            _
        $region160: #{tpu_custom_call.1} parent=35 // pred_fallthru
          _
        // Predicated region
        $region161: #{tpu_custom_call.1} parent=35 // pred_check
          %p451 = pneg %p447
        $region162: #{tpu_custom_call.1} parent=35 // pred_check_branch
          %453 = sbr.rel (%p451) target = $region164
        $region163: #{tpu_custom_call.1} parent=35 // pred_region
          %s454 = sshllo.u32 0, 1
          loop: start=0, step=1, limit=1
          $region165: #{tpu_custom_call.1} parent=163 // loop_pre_header
            _
          $region166: #{tpu_custom_call.1} parent=163 // loop_header
            %s456 = sphi 0, %s460
            %p457 = scmp.ge.s32.totalorder %s456, 1
            %s461 = sphi %s444, %s444
            %s462 = sphi %s445, %s445
          $region167: #{tpu_custom_call.1} parent=163 // loop_header_branch
            %459 = sbr.rel (%p457) target = $region171
          $region168: #{tpu_custom_call.1} parent=163 // loop_body
            %v463 = vld [vmem:[%s461] sm:%s454]
            %464 = vst [vmem:[%s462] sm:%s454] %v463
          $region169: #{tpu_custom_call.1} parent=163 // loop_footer
            %s460 = sadd.s32 1, %s456
          $region170: #{tpu_custom_call.1} parent=163 // loop_footer_branch
            %455 = sbr.rel target = $region166
          $region171: #{tpu_custom_call.1} parent=163 // loop_exit
            _
        $region164: #{tpu_custom_call.1} parent=35 // pred_fallthru
          _
        // Predicated region
        $region183: #{tpu_custom_call.1} parent=35 // pred_check
          _
        $region184: #{tpu_custom_call.1} parent=35 // pred_check_branch
          %488 = sbr.rel (0) target = $region186
        $region185: #{tpu_custom_call.1} parent=35 // pred_region
          %489 = vsyncadd [#allocation3], 16
        $region186: #{tpu_custom_call.1} parent=35 // pred_fallthru
          _
        %s490 = scalar_lea.vmem %s1, %s256
        %s491 = scalar_lea.vmem [#allocation2], 5
        %p493 = scmp.lt.u32.totalorder 1, 8
        %p494 = pneg %p493
        // Predicated region
        $region187: #{tpu_custom_call.1} parent=35 // pred_check
          _
        $region188: #{tpu_custom_call.1} parent=35 // pred_check_branch
          %496 = sbr.rel (%p493) target = $region190
        $region189: #{tpu_custom_call.1} parent=35 // pred_region
          %s511 = sand.u32 1, 7
          %p512 = scmp.eq.s32.totalorder %s511, 0
          %p513 = pneg %p512
          // Predicated region
          $region202: #{tpu_custom_call.1} parent=189 // pred_check
            _
          $region203: #{tpu_custom_call.1} parent=189 // pred_check_branch
            %515 = sbr.rel (%p512) target = $region205
          $region204: #{tpu_custom_call.1} parent=189 // pred_region
            %s516 = sand.u32 1, 7
            %s517 = ssub.s32 1, %s516
            %s518 = scalar_lea.vmem %s490, %s517
            %s519 = ssub.s32 1, %s516
            %s520 = scalar_lea.vmem %s491, %s519 [#allocation2]
            %s521 = sshllo.u32 0, %s516
            loop: start=0, step=1, limit=1
            $region206: #{tpu_custom_call.1} parent=204 // loop_pre_header
              _
            $region207: #{tpu_custom_call.1} parent=204 // loop_header
              %s523 = sphi 0, %s527
              %p524 = scmp.ge.s32.totalorder %s523, 1
              %s528 = sphi %s518, %s518
              %s529 = sphi %s520, %s520
            $region208: #{tpu_custom_call.1} parent=204 // loop_header_branch
              %526 = sbr.rel (%p524) target = $region212
            $region209: #{tpu_custom_call.1} parent=204 // loop_body
              %v530 = vld [vmem:[%s528] sm:%s521]
              %531 = vst [vmem:[%s529] sm:%s521] %v530
            $region210: #{tpu_custom_call.1} parent=204 // loop_footer
              %s527 = sadd.s32 1, %s523
            $region211: #{tpu_custom_call.1} parent=204 // loop_footer_branch
              %522 = sbr.rel target = $region207
            $region212: #{tpu_custom_call.1} parent=204 // loop_exit
              _
          $region205: #{tpu_custom_call.1} parent=189 // pred_fallthru
            _
        $region190: #{tpu_custom_call.1} parent=35 // pred_fallthru
          _
        // Predicated region
        $region191: #{tpu_custom_call.1} parent=35 // pred_check
          %p497 = pneg %p493
        $region192: #{tpu_custom_call.1} parent=35 // pred_check_branch
          %499 = sbr.rel (%p497) target = $region194
        $region193: #{tpu_custom_call.1} parent=35 // pred_region
          %s500 = sshllo.u32 0, 1
          loop: start=0, step=1, limit=1
          $region195: #{tpu_custom_call.1} parent=193 // loop_pre_header
            _
          $region196: #{tpu_custom_call.1} parent=193 // loop_header
            %s502 = sphi 0, %s506
            %p503 = scmp.ge.s32.totalorder %s502, 1
            %s507 = sphi %s490, %s490
            %s508 = sphi %s491, %s491
          $region197: #{tpu_custom_call.1} parent=193 // loop_header_branch
            %505 = sbr.rel (%p503) target = $region201
          $region198: #{tpu_custom_call.1} parent=193 // loop_body
            %v509 = vld [vmem:[%s507] sm:%s500]
            %510 = vst [vmem:[%s508] sm:%s500] %v509
          $region199: #{tpu_custom_call.1} parent=193 // loop_footer
            %s506 = sadd.s32 1, %s502
          $region200: #{tpu_custom_call.1} parent=193 // loop_footer_branch
            %501 = sbr.rel target = $region196
          $region201: #{tpu_custom_call.1} parent=193 // loop_exit
            _
        $region194: #{tpu_custom_call.1} parent=35 // pred_fallthru
          _
        // Predicated region
        $region213: #{tpu_custom_call.1} parent=35 // pred_check
          _
        $region214: #{tpu_custom_call.1} parent=35 // pred_check_branch
          %534 = sbr.rel (0) target = $region216
        $region215: #{tpu_custom_call.1} parent=35 // pred_region
          %535 = vsyncadd [#allocation3], 16
        $region216: #{tpu_custom_call.1} parent=35 // pred_fallthru
          _
        %s536 = scalar_lea.vmem %s1, %s258
        %s537 = scalar_lea.vmem [#allocation2], 6
        %p539 = scmp.lt.u32.totalorder 1, 8
        %p540 = pneg %p539
        // Predicated region
        $region217: #{tpu_custom_call.1} parent=35 // pred_check
          _
        $region218: #{tpu_custom_call.1} parent=35 // pred_check_branch
          %542 = sbr.rel (%p539) target = $region220
        $region219: #{tpu_custom_call.1} parent=35 // pred_region
          %s557 = sand.u32 1, 7
          %p558 = scmp.eq.s32.totalorder %s557, 0
          %p559 = pneg %p558
          // Predicated region
          $region232: #{tpu_custom_call.1} parent=219 // pred_check
            _
          $region233: #{tpu_custom_call.1} parent=219 // pred_check_branch
            %561 = sbr.rel (%p558) target = $region235
          $region234: #{tpu_custom_call.1} parent=219 // pred_region
            %s562 = sand.u32 1, 7
            %s563 = ssub.s32 1, %s562
            %s564 = scalar_lea.vmem %s536, %s563
            %s565 = ssub.s32 1, %s562
            %s566 = scalar_lea.vmem %s537, %s565 [#allocation2]
            %s567 = sshllo.u32 0, %s562
            loop: start=0, step=1, limit=1
            $region236: #{tpu_custom_call.1} parent=234 // loop_pre_header
              _
            $region237: #{tpu_custom_call.1} parent=234 // loop_header
              %s569 = sphi 0, %s573
              %p570 = scmp.ge.s32.totalorder %s569, 1
              %s574 = sphi %s564, %s564
              %s575 = sphi %s566, %s566
            $region238: #{tpu_custom_call.1} parent=234 // loop_header_branch
              %572 = sbr.rel (%p570) target = $region242
            $region239: #{tpu_custom_call.1} parent=234 // loop_body
              %v576 = vld [vmem:[%s574] sm:%s567]
              %577 = vst [vmem:[%s575] sm:%s567] %v576
            $region240: #{tpu_custom_call.1} parent=234 // loop_footer
              %s573 = sadd.s32 1, %s569
            $region241: #{tpu_custom_call.1} parent=234 // loop_footer_branch
              %568 = sbr.rel target = $region237
            $region242: #{tpu_custom_call.1} parent=234 // loop_exit
              _
          $region235: #{tpu_custom_call.1} parent=219 // pred_fallthru
            _
        $region220: #{tpu_custom_call.1} parent=35 // pred_fallthru
          _
        // Predicated region
        $region221: #{tpu_custom_call.1} parent=35 // pred_check
          %p543 = pneg %p539
        $region222: #{tpu_custom_call.1} parent=35 // pred_check_branch
          %545 = sbr.rel (%p543) target = $region224
        $region223: #{tpu_custom_call.1} parent=35 // pred_region
          %s546 = sshllo.u32 0, 1
          loop: start=0, step=1, limit=1
          $region225: #{tpu_custom_call.1} parent=223 // loop_pre_header
            _
          $region226: #{tpu_custom_call.1} parent=223 // loop_header
            %s548 = sphi 0, %s552
            %p549 = scmp.ge.s32.totalorder %s548, 1
            %s553 = sphi %s536, %s536
            %s554 = sphi %s537, %s537
          $region227: #{tpu_custom_call.1} parent=223 // loop_header_branch
            %551 = sbr.rel (%p549) target = $region231
          $region228: #{tpu_custom_call.1} parent=223 // loop_body
            %v555 = vld [vmem:[%s553] sm:%s546]
            %556 = vst [vmem:[%s554] sm:%s546] %v555
          $region229: #{tpu_custom_call.1} parent=223 // loop_footer
            %s552 = sadd.s32 1, %s548
          $region230: #{tpu_custom_call.1} parent=223 // loop_footer_branch
            %547 = sbr.rel target = $region226
          $region231: #{tpu_custom_call.1} parent=223 // loop_exit
            _
        $region224: #{tpu_custom_call.1} parent=35 // pred_fallthru
          _
        // Predicated region
        $region243: #{tpu_custom_call.1} parent=35 // pred_check
          _
        $region244: #{tpu_custom_call.1} parent=35 // pred_check_branch
          %580 = sbr.rel (0) target = $region246
        $region245: #{tpu_custom_call.1} parent=35 // pred_region
          %581 = vsyncadd [#allocation3], 16
        $region246: #{tpu_custom_call.1} parent=35 // pred_fallthru
          _
        %s582 = scalar_lea.vmem %s1, %s260
        %s583 = scalar_lea.vmem [#allocation2], 7
        %p585 = scmp.lt.u32.totalorder 1, 8
        %p586 = pneg %p585
        // Predicated region
        $region247: #{tpu_custom_call.1} parent=35 // pred_check
          _
        $region248: #{tpu_custom_call.1} parent=35 // pred_check_branch
          %588 = sbr.rel (%p585) target = $region250
        $region249: #{tpu_custom_call.1} parent=35 // pred_region
          %s603 = sand.u32 1, 7
          %p604 = scmp.eq.s32.totalorder %s603, 0
          %p605 = pneg %p604
          // Predicated region
          $region262: #{tpu_custom_call.1} parent=249 // pred_check
            _
          $region263: #{tpu_custom_call.1} parent=249 // pred_check_branch
            %607 = sbr.rel (%p604) target = $region265
          $region264: #{tpu_custom_call.1} parent=249 // pred_region
            %s608 = sand.u32 1, 7
            %s609 = ssub.s32 1, %s608
            %s610 = scalar_lea.vmem %s582, %s609
            %s611 = ssub.s32 1, %s608
            %s612 = scalar_lea.vmem %s583, %s611 [#allocation2]
            %s613 = sshllo.u32 0, %s608
            loop: start=0, step=1, limit=1
            $region266: #{tpu_custom_call.1} parent=264 // loop_pre_header
              _
            $region267: #{tpu_custom_call.1} parent=264 // loop_header
              %s615 = sphi 0, %s619
              %p616 = scmp.ge.s32.totalorder %s615, 1
              %s620 = sphi %s610, %s610
              %s621 = sphi %s612, %s612
            $region268: #{tpu_custom_call.1} parent=264 // loop_header_branch
              %618 = sbr.rel (%p616) target = $region272
            $region269: #{tpu_custom_call.1} parent=264 // loop_body
              %v622 = vld [vmem:[%s620] sm:%s613]
              %623 = vst [vmem:[%s621] sm:%s613] %v622
            $region270: #{tpu_custom_call.1} parent=264 // loop_footer
              %s619 = sadd.s32 1, %s615
            $region271: #{tpu_custom_call.1} parent=264 // loop_footer_branch
              %614 = sbr.rel target = $region267
            $region272: #{tpu_custom_call.1} parent=264 // loop_exit
              _
          $region265: #{tpu_custom_call.1} parent=249 // pred_fallthru
            _
        $region250: #{tpu_custom_call.1} parent=35 // pred_fallthru
          _
        // Predicated region
        $region251: #{tpu_custom_call.1} parent=35 // pred_check
          %p589 = pneg %p585
        $region252: #{tpu_custom_call.1} parent=35 // pred_check_branch
          %591 = sbr.rel (%p589) target = $region254
        $region253: #{tpu_custom_call.1} parent=35 // pred_region
          %s592 = sshllo.u32 0, 1
          loop: start=0, step=1, limit=1
          $region255: #{tpu_custom_call.1} parent=253 // loop_pre_header
            _
          $region256: #{tpu_custom_call.1} parent=253 // loop_header
            %s594 = sphi 0, %s598
            %p595 = scmp.ge.s32.totalorder %s594, 1
            %s599 = sphi %s582, %s582
            %s600 = sphi %s583, %s583
          $region257: #{tpu_custom_call.1} parent=253 // loop_header_branch
            %597 = sbr.rel (%p595) target = $region261
          $region258: #{tpu_custom_call.1} parent=253 // loop_body
            %v601 = vld [vmem:[%s599] sm:%s592]
            %602 = vst [vmem:[%s600] sm:%s592] %v601
          $region259: #{tpu_custom_call.1} parent=253 // loop_footer
            %s598 = sadd.s32 1, %s594
          $region260: #{tpu_custom_call.1} parent=253 // loop_footer_branch
            %593 = sbr.rel target = $region256
          $region261: #{tpu_custom_call.1} parent=253 // loop_exit
            _
        $region254: #{tpu_custom_call.1} parent=35 // pred_fallthru
          _
        // Predicated region
        $region273: #{tpu_custom_call.1} parent=35 // pred_check
          _
        $region274: #{tpu_custom_call.1} parent=35 // pred_check_branch
          %626 = sbr.rel (0) target = $region276
        $region275: #{tpu_custom_call.1} parent=35 // pred_region
          %627 = vsyncadd [#allocation3], 16
        $region276: #{tpu_custom_call.1} parent=35 // pred_fallthru
          _
        %s628 = smul.u32 1, 1
        %s629 = sshll.u32 %s628, 4
        %630 = dma.done [#allocation3], %s629
        %s631 = sshll.u32 %s628, 4
        %632 = dma.done [#allocation3], %s631
        %s633 = sshll.u32 %s628, 4
        %634 = dma.done [#allocation3], %s633
        %s635 = sshll.u32 %s628, 4
        %636 = dma.done [#allocation3], %s635
        %s637 = sshll.u32 %s628, 4
        %638 = dma.done [#allocation3], %s637
        %s639 = sshll.u32 %s628, 4
        %640 = dma.done [#allocation3], %s639
        %s641 = sshll.u32 %s628, 4
        %642 = dma.done [#allocation3], %s641
        %s643 = sshll.u32 %s628, 4
        %644 = dma.done [#allocation3], %s643
        %v645 = vld [vmem:[#allocation2] sm:$0xff]
        %v646 = vld [vmem:[%s235] sm:$0xff]
        %v647 = vld [vmem:[%s242] sm:$0xff]
        %vm648 = vcmp.eq.s32.totalorder %v647, 0
        %v649 = vsel %vm648, 1.0, 0.0
        %v650 = vld [vmem:[%s4] sm:$0x1]
        %652 = vset.pattern.permute.xlu0 0
        %653 = vperm.xlu0 %652, %v649
        %v654 = vpop.permute.xlu0 %653
        %v656 = vlaneseq
        %v657 = vshrl.u32 %v656, 7
        %v658 = vsub.s32 0, %v657
        %v659 = vrot.slane %v650, %v658
        %v660 = vmul.f32 %v654, %v659
        %v661 = vadd.f32 %v660, 0.0
        %vm662 = vcmp.eq.s32.totalorder %v647, 1
        %v663 = vsel %vm662, 1.0, 0.0
        %v664 = vld [vmem:[%s4 + $0x1] sm:$0x1]
        %666 = vset.pattern.permute.xlu0 0
        %667 = vperm.xlu0 %666, %v663
        %v668 = vpop.permute.xlu0 %667
        %v670 = vlaneseq
        %v671 = vshrl.u32 %v670, 7
        %v672 = vsub.s32 0, %v671
        %v673 = vrot.slane %v664, %v672
        %v674 = vmul.f32 %v668, %v673
        %v675 = vadd.f32 %v661, %v674
        %v676 = vadd.f32 %v645, %v646
        %v677 = vadd.f32 %v676, %v675
        %vm678 = vcmask 261120
        %v679 = vsel %vm678, %v677, 0.0
        %680 = vadd.xlane.f32.xlu0 %v679
        %v681 = vpop.xlane.xlu0 %680
        %v682 = vrcp.pop 32.0
        %v683 = vmul.f32 %v681, %v682
        %v684 = vsub.f32 %v677, %v683
        %v685 = vmul.f32 %v684, %v684
        %v686 = vsel %vm678, %v685, 0.0
        %687 = vadd.xlane.f32.xlu0 %v686
        %v688 = vpop.xlane.xlu0 %687
        %v689 = vmul.f32 %v688, %v682
        %v690 = vadd.f32 %v689, 1e-05
        %v691 = vrsqrt.pop %v690
        %v692 = vld [vmem:[%s5] sm:$0x1]
        %v693 = vld [vmem:[%s5 + $0x1] sm:$0x1]
        %v694 = vmul.f32 %v684, %v691
        %v695 = vlaneseq
        %v696 = vshrl.u32 %v695, 7
        %v697 = vsub.s32 0, %v696
        %v698 = vrot.slane %v692, %v697
        %v699 = vmul.f32 %v694, %v698
        %v700 = vlaneseq
        %v701 = vshrl.u32 %v700, 7
        %v702 = vsub.s32 0, %v701
        %v703 = vrot.slane %v693, %v702
        %v704 = vadd.f32 %v699, %v703
        %705 = vst.msk [vmem:[%s231] sm:$0xff] %vm678, %v704
        %s706 = sand.u32 %s144, 1
        %s707 = scalar_lea.sflag [#allocation7], %s706
        %s708 = sand.u32 %s144, 1
        %s709 = smul.addr %s708, 8
        %s710 = scalar_lea.vmem [#allocation6], %s709
        // Predicated region
        $region277: #{tpu_custom_call.1} parent=35 // pred_check
          %p711 = pneg %p154
        $region278: #{tpu_custom_call.1} parent=35 // pred_check_branch
          %713 = sbr.rel (%p711) target = $region280
        $region279: #{tpu_custom_call.1} parent=35 // pred_region
          %s715 = ssub.s32 128, 128
          %716 = vsyncadd %s707, %s715
          %s717 = sadd.s32 %s31, %s30
          %s718 = smul.addr %s717, 128
          %s719 = scalar_lea.hbm %s6, %s718
          %s721 = sshll.u32 %s710, 4
          %s722 = int_to_ptr.vmem [resolvable:$true] %s721
          %724 = dma.vmem_to_hbm [thread:$0]  %s722, 128, %s719, %s707
        $region280: #{tpu_custom_call.1} parent=35 // pred_fallthru
          _
      $region36: #{tpu_custom_call.1} parent=5 // pred_fallthru
        _
      %p725 = scmp.le.s32.totalorder 2, %s21
      // Predicated region
      $region281: #{tpu_custom_call.1} parent=5 // pred_check
        %p726 = pneg %p725
      $region282: #{tpu_custom_call.1} parent=5 // pred_check_branch
        %728 = sbr.rel (%p726) target = $region284
      $region283: #{tpu_custom_call.1} parent=5 // pred_region
        %s729 = ssub.s32 %s21, 2
        // Predicated region
        $region285: #{tpu_custom_call.1} parent=283 // pred_check
          %p730 = pneg %p160
        $region286: #{tpu_custom_call.1} parent=283 // pred_check_branch
          %732 = sbr.rel (%p730) target = $region288
        $region287: #{tpu_custom_call.1} parent=283 // pred_region
          %s733 = sand.u32 %s145, 1
          %s734 = scalar_lea.sflag [#allocation7], %s733
          %s735 = sand.u32 %s145, 1
          %s736 = smul.addr %s735, 8
          %s737 = scalar_lea.vmem [#allocation6], %s736
          %738 = dma.done %s734, 128
        $region288: #{tpu_custom_call.1} parent=283 // pred_fallthru
          _
      $region284: #{tpu_custom_call.1} parent=5 // pred_fallthru
        _
    $region6: #{tpu_custom_call.1} parent=1 // loop_footer
      %s25 = sadd.s32 1, %s21
    $region7: #{tpu_custom_call.1} parent=1 // loop_footer_branch
      %20 = sbr.rel target = $region3
    $region8: #{tpu_custom_call.1} parent=1 // loop_exit
      _
    %739 = vsyncpa [#allocation7], 1
    %s740 = scalar_lea.sflag [#allocation7], 1
    %741 = vsyncpa %s740, 1
  %742 = vsyncmov [#allocation3]
  %s743 = vpop.sfrf %742
  %p744 = scmp.eq.s32.totalorder %s743, 0
  %p745 = pneg %p744
  %747 = shalt.err (%p745)

</llo_original>
